<compile_context>
chip_gen: v6e
topology: v6e:2x2x1
jax: 0.10.0
libtpu: 0.0.40
codegen_flags: <defaults>
</compile_context>

<pallas_src>
import math

import jax
import jax.numpy as jnp
from jax.experimental import pallas as pl
from jax.experimental.pallas import tpu as pltpu


# -----------------------------------------------------------------------------
# Kernel bodies
# -----------------------------------------------------------------------------
def _rotate_block(x, cw, se, so):
    """Rotate one (tile_b, tile_s, Hf, W) block; cw/se/so are (tile_s, W)."""
    x = x.astype(jnp.float32)
    w = x.shape[-1]
    lane_axis = x.ndim - 1
    # np.roll semantics: roll(x, s)[..., c] == x[..., (c - s) % w]
    x_next = pltpu.roll(x, shift=w - 1, axis=lane_axis)   # x[..., c + 1] at lane c
    x_prev = pltpu.roll(x, shift=1, axis=lane_axis)       # x[..., c - 1] at lane c
    cw = cw[None, :, None, :]                              # broadcast over batch, heads
    se = se[None, :, None, :]
    so = so[None, :, None, :]
    return x * cw + x_next * se + x_prev * so


def _rope_fused_kernel(q_ref, k_ref, tab_ref, oq_ref, ok_ref):
    cw = tab_ref[0]   # (tile_s, W)
    se = tab_ref[1]
    so = tab_ref[2]
    oq_ref[...] = _rotate_block(q_ref[...], cw, se, so)
    ok_ref[...] = _rotate_block(k_ref[...], cw, se, so)


def _rope_single_kernel(x_ref, tab_ref, o_ref):
    o_ref[...] = _rotate_block(x_ref[...], tab_ref[0], tab_ref[1], tab_ref[2])


# -----------------------------------------------------------------------------
# Tiling helpers
# -----------------------------------------------------------------------------
def _vmem_budget():
    """(per-step target bytes, explicit vmem_limit_bytes), generation-aware."""
    try:
        cap = int(pltpu.get_tpu_info().vmem_capacity_bytes)
    except Exception:
        cap = 128 << 20
    # 128 MiB VMEM parts (v5e/v6e): ~8 MiB per step; 64 MiB parts (v7x): ~6 MiB.
    target = (8 << 20) if cap >= (96 << 20) else (6 << 20)
    limit = int(min(cap // 2, 64 << 20))
    return target, limit


def _pick_tiles(batch, seq, row_bytes, target_bytes):
    """Pick (tile_b, tile_s).  row_bytes = HBM bytes (in+out) per (b, s) row."""
    row_bytes = max(int(row_bytes), 1)
    rows_target = max(1, target_bytes // row_bytes)
    if seq <= 8:
        tile_s = seq
    else:
        tile_s = min(seq, max(8, (rows_target // 8) * 8))
    tile_b = 1
    if tile_s >= seq:
        # Small / decode-shaped seq: fold batch into the block so each grid
        # step moves a meaningful amount of data (per-step overhead ~0.35us).
        tile_s = seq
        tile_b = int(min(batch, max(1, rows_target // max(seq, 1))))
    return tile_b, tile_s


def _pick_fold(head_dim, head_counts):
    """Heads folded into the lane dim; must divide every head count."""
    g = 0
    for h in head_counts:
        g = math.gcd(g, int(h))
    if head_dim % 128 == 0:
        return 1                      # already lane-dense
    if 128 % head_dim != 0:
        return 1                      # cannot fold cleanly to 128
    return max(1, math.gcd(g, 128 // head_dim))


# -----------------------------------------------------------------------------
# pallas_call wrappers
# -----------------------------------------------------------------------------
def _rope_pallas_fused(q, k, tab, fold):
    B, S, Hq, D = q.shape
    _, _, Hk, _ = k.shape
    W = fold * D
    qf = q.reshape(B, S, Hq // fold, W)          # free reshape (contiguous)
    kf = k.reshape(B, S, Hk // fold, W)
    tabf = tab if fold == 1 else jnp.tile(tab, (1, 1, fold))   # (3, S, W), tiny

    row_bytes = (Hq + Hk) * D * (q.dtype.itemsize + 4)
    target, vmem_limit = _vmem_budget()
    tile_b, tile_s = _pick_tiles(B, S, row_bytes, target)
    grid = (pl.cdiv(S, tile_s), pl.cdiv(B, tile_b))

    def xspec(hf):
        return pl.BlockSpec((tile_b, tile_s, hf, W), lambda i, b: (b, i, 0, 0))

    tab_spec = pl.BlockSpec((3, tile_s, W), lambda i, b: (0, i, 0))

    oq, ok = pl.pallas_call(
        _rope_fused_kernel,
        out_shape=(
            jax.ShapeDtypeStruct((B, S, Hq // fold, W), jnp.float32),
            jax.ShapeDtypeStruct((B, S, Hk // fold, W), jnp.float32),
        ),
        grid=grid,
        in_specs=[xspec(Hq // fold), xspec(Hk // fold), tab_spec],
        out_specs=(xspec(Hq // fold), xspec(Hk // fold)),
        compiler_params=pltpu.CompilerParams(
            dimension_semantics=("parallel", "parallel"),
            vmem_limit_bytes=vmem_limit),
    )(qf, kf, tabf)
    return oq.reshape(B, S, Hq, D), ok.reshape(B, S, Hk, D)


def _rope_pallas_one(x, tab, fold):
    B, S, H, D = x.shape
    W = fold * D
    xf = x.reshape(B, S, H // fold, W)
    tabf = tab if fold == 1 else jnp.tile(tab, (1, 1, fold))

    row_bytes = H * D * (x.dtype.itemsize + 4)
    target, vmem_limit = _vmem_budget()
    tile_b, tile_s = _pick_tiles(B, S, row_bytes, target)
    grid = (pl.cdiv(S, tile_s), pl.cdiv(B, tile_b))

    xspec = pl.BlockSpec((tile_b, tile_s, H // fold, W), lambda i, b: (b, i, 0, 0))
    tab_spec = pl.BlockSpec((3, tile_s, W), lambda i, b: (0, i, 0))

    out = pl.pallas_call(
        _rope_single_kernel,
        out_shape=jax.ShapeDtypeStruct((B, S, H // fold, W), jnp.float32),
        grid=grid,
        in_specs=[xspec, tab_spec],
        out_specs=xspec,
        compiler_params=pltpu.CompilerParams(
            dimension_semantics=("parallel", "parallel"),
            vmem_limit_bytes=vmem_limit),
    )(xf, tabf)
    return out.reshape(B, S, H, D)


# -----------------------------------------------------------------------------
# Module equivalent
# -----------------------------------------------------------------------------
class RotaryEmbedding:
    def __init__(self, model_dim, n_query_heads, context_length, rope_theta=10000.0):
        assert model_dim % n_query_heads == 0
        head_dim = model_dim // n_query_heads
        assert head_dim % 2 == 0
        self.head_dim = head_dim
        self.max_pos = 2 * context_length

        numerator = jnp.arange(0, head_dim, 2, dtype=jnp.float32)          # (P,)
        freqs = 1.0 / (rope_theta ** (numerator / head_dim))               # (P,)
        t = jnp.arange(self.max_pos, dtype=jnp.float32)                    # (2*ctx,)
        angles = jnp.outer(t, freqs)                                       # (2*ctx, P)
        cos = jnp.cos(angles)
        sin = jnp.sin(angles)
        zeros = jnp.zeros_like(sin)
        n = self.max_pos
        # Interleaved head_dim-wide coefficient tables for the one-pass kernel:
        #   cos_wide = [c0, c0, c1, c1, ...]
        #   sin_even = [-s0, 0, -s1, 0, ...]   (multiplies the +1 lane neighbour)
        #   sin_odd  = [ 0, s0,  0, s1, ...]   (multiplies the -1 lane neighbour)
        cos_wide = jnp.repeat(cos, 2, axis=-1)
        sin_even = jnp.stack([-sin, zeros], axis=-1).reshape(n, head_dim)
        sin_odd = jnp.stack([zeros, sin], axis=-1).reshape(n, head_dim)
        # Packed (3, 2*ctx, head_dim) table -> a single DMA input per grid step.
        self.table = jnp.stack([cos_wide, sin_even, sin_odd], axis=0)

    def _check_range(self, start, length):
        if isinstance(start, int) and (start < 0 or start + length > self.max_pos):
            raise ValueError(
                f"RoPE positions [{start}, {start + length}) exceed precomputed "
                f"table of {self.max_pos} rows")

    def _slice_table(self, start, length):
        return jax.lax.dynamic_slice_in_dim(self.table, start, length, axis=1)

    def __call__(self, query, key, start_pos=None):
        sp = 0 if start_pos is None else start_pos
        Bq, q_len, Hq, D = query.shape
        Bk, k_len, Hk, Dk = key.shape
        assert D == self.head_dim and Dk == self.head_dim
        self._check_range(sp, q_len)
        self._check_range(sp, k_len)

        if q_len == k_len and Bq == Bk:
            fold = _pick_fold(D, [Hq, Hk])
            tab = self._slice_table(sp, q_len)
            return _rope_pallas_fused(query, key, tab, fold)

        # Fallback (different seq lengths): two single-tensor calls.
        q_out = _rope_pallas_one(query, self._slice_table(sp, q_len), _pick_fold(D, [Hq]))
        k_out = _rope_pallas_one(key, self._slice_table(sp, k_len), _pick_fold(D, [Hk]))
        return q_out, k_out


# -----------------------------------------------------------------------------
# Pure-JAX reference (for correctness check)
# -----------------------------------------------------------------------------
def _rope_reference(x, start, rope_theta=10000.0):
    B, S, H, D = x.shape
    P = D // 2
    numerator = jnp.arange(0, D, 2, dtype=jnp.float32)
    freqs = 1.0 / (rope_theta ** (numerator / D))
    t = jnp.arange(start, start + S, dtype=jnp.float32)
    ang = jnp.outer(t, freqs)                              # (S, P)
    c = jnp.cos(ang)[None, :, None, :]
    s = jnp.sin(ang)[None, :, None, :]
    xr = x.astype(jnp.float32).reshape(B, S, H, P, 2)
    xe, xo = xr[..., 0], xr[..., 1]
    oe = xe * c - xo * s
    oo = xe * s + xo * c
    return jnp.stack([oe, oo], axis=-1).reshape(B, S, H, D)


if __name__ == "__main__":
    # ---- Config A: model_dim=32, n_heads=4 -> head_dim=8, context_length=16
    batch, seq = 2, 8
    model_dim, n_heads, context_length = 32, 4, 16
    head_dim = model_dim // n_heads

    key0 = jax.random.PRNGKey(0)
    kq, kk, kk2, kq3, kk3 = jax.random.split(key0, 5)
    query = jax.random.normal(kq, (batch, seq, n_heads, head_dim), dtype=jnp.float32)
    key_t = jax.random.normal(kk, (batch, seq, n_heads, head_dim), dtype=jnp.float32)

    rope = RotaryEmbedding(model_dim, n_heads, context_length, rope_theta=10000.0)

    # 1) fused path, start_pos=None
    q_out, k_out = rope(query, key_t, start_pos=None)
    q_out = jax.block_until_ready(q_out)
    k_out = jax.block_until_ready(k_out)
    assert q_out.shape == query.shape and q_out.dtype == jnp.float32
    assert k_out.shape == key_t.shape and k_out.dtype == jnp.float32
    assert jnp.allclose(q_out, _rope_reference(query, 0), atol=1e-5, rtol=1e-5)
    assert jnp.allclose(k_out, _rope_reference(key_t, 0), atol=1e-5, rtol=1e-5)

    # 2) fused path, nonzero start_pos
    q_out3, k_out3 = rope(query, key_t, start_pos=3)
    q_out3 = jax.block_until_ready(q_out3)
    assert jnp.allclose(q_out3, _rope_reference(query, 3), atol=1e-5, rtol=1e-5)
    assert jnp.allclose(k_out3, _rope_reference(key_t, 3), atol=1e-5, rtol=1e-5)

    # 3) fallback path: key with a different sequence length
    key_short = jax.random.normal(kk2, (batch, 4, n_heads, head_dim), dtype=jnp.float32)
    q_out2, k_out2 = rope(query, key_short, start_pos=None)
    q_out2 = jax.block_until_ready(q_out2)
    k_out2 = jax.block_until_ready(k_out2)
    assert jnp.allclose(q_out2, _rope_reference(query, 0), atol=1e-5, rtol=1e-5)
    assert jnp.allclose(k_out2, _rope_reference(key_short, 0), atol=1e-5, rtol=1e-5)

    # 4) out-of-range static start_pos is rejected (table-clamp guard)
    try:
        rope(query, key_t, start_pos=2 * context_length)
        raise AssertionError("expected ValueError for out-of-range start_pos")
    except ValueError:
        pass

    # ---- Config B: lane-dense fold path (head_dim=64, fold=2 -> 128 lanes)
    md_b, nh_b = 128, 2
    hd_b = md_b // nh_b
    rope_b = RotaryEmbedding(md_b, nh_b, context_length, rope_theta=10000.0)
    q_b = jax.random.normal(kq3, (batch, seq, nh_b, hd_b), dtype=jnp.float32)
    k_b = jax.random.normal(kk3, (batch, seq, nh_b, hd_b), dtype=jnp.float32)
    qb_out, kb_out = rope_b(q_b, k_b, start_pos=2)
    qb_out = jax.block_until_ready(qb_out)
    kb_out = jax.block_until_ready(kb_out)
    assert jnp.allclose(qb_out, _rope_reference(q_b, 2), atol=1e-5, rtol=1e-5)
    assert jnp.allclose(kb_out, _rope_reference(k_b, 2), atol=1e-5, rtol=1e-5)

    print("KERNEL_OK")
</pallas_src>

<mosaic_0001>
module attributes {stable_mosaic.version = 11 : i64} {
  func.func @_rope_fused_kernel(%arg0: i32, %arg1: i32, %arg2: memref<2x8x1x32xf32, #tpu.memory_space<vmem>>, %arg3: memref<2x8x1x32xf32, #tpu.memory_space<vmem>>, %arg4: memref<3x8x32xf32, #tpu.memory_space<vmem>>, %arg5: memref<2x8x1x32xf32, #tpu.memory_space<vmem>>, %arg6: memref<2x8x1x32xf32, #tpu.memory_space<vmem>>) attributes {dimension_semantics = [#tpu.dimension_semantics<parallel>, #tpu.dimension_semantics<parallel>], iteration_bounds = array<i64: 1, 1>, scalar_prefetch = 0 : i64, scratch_operands = 0 : i64, tpu.core_type = #tpu.core_type<tc>, window_params = [{transform_indices = @transform_0, window_bounds = array<i64: 2, 8, 1, 32>}, {transform_indices = @transform_1, window_bounds = array<i64: 2, 8, 1, 32>}, {transform_indices = @transform_2, window_bounds = array<i64: 3, 8, 32>}, {transform_indices = @transform_3, window_bounds = array<i64: 2, 8, 1, 32>}, {transform_indices = @transform_4, window_bounds = array<i64: 2, 8, 1, 32>}]} {
    %c0 = arith.constant 0 : index
    %c0_0 = arith.constant 0 : index
    %c0_1 = arith.constant 0 : index
    %0 = vector.load %arg4[%c0, %c0_0, %c0_1] : memref<3x8x32xf32, #tpu.memory_space<vmem>>, vector<1x8x32xf32>
    %1 = vector.shape_cast %0 : vector<1x8x32xf32> to vector<8x32xf32>
    %c1 = arith.constant 1 : index
    %c0_2 = arith.constant 0 : index
    %c0_3 = arith.constant 0 : index
    %2 = vector.load %arg4[%c1, %c0_2, %c0_3] : memref<3x8x32xf32, #tpu.memory_space<vmem>>, vector<1x8x32xf32>
    %3 = vector.shape_cast %2 : vector<1x8x32xf32> to vector<8x32xf32>
    %c2 = arith.constant 2 : index
    %c0_4 = arith.constant 0 : index
    %c0_5 = arith.constant 0 : index
    %4 = vector.load %arg4[%c2, %c0_4, %c0_5] : memref<3x8x32xf32, #tpu.memory_space<vmem>>, vector<1x8x32xf32>
    %5 = vector.shape_cast %4 : vector<1x8x32xf32> to vector<8x32xf32>
    %c0_6 = arith.constant 0 : index
    %c0_7 = arith.constant 0 : index
    %c0_8 = arith.constant 0 : index
    %c0_9 = arith.constant 0 : index
    %6 = vector.load %arg2[%c0_6, %c0_7, %c0_8, %c0_9] : memref<2x8x1x32xf32, #tpu.memory_space<vmem>>, vector<2x8x1x32xf32>
    %c31_i32 = arith.constant 31 : i32
    %7 = tpu.dynamic_rotate %6 by %c31_i32 dim 3 : vector<2x8x1x32xf32>, i32 -> vector<2x8x1x32xf32>
    %c1_i32 = arith.constant 1 : i32
    %8 = tpu.dynamic_rotate %6 by %c1_i32 dim 3 : vector<2x8x1x32xf32>, i32 -> vector<2x8x1x32xf32>
    %9 = vector.shape_cast %1 : vector<8x32xf32> to vector<1x8x1x32xf32>
    %10 = vector.shape_cast %3 : vector<8x32xf32> to vector<1x8x1x32xf32>
    %11 = vector.shape_cast %5 : vector<8x32xf32> to vector<1x8x1x32xf32>
    %12 = vector.broadcast %9 : vector<1x8x1x32xf32> to vector<2x8x1x32xf32>
    %13 = arith.mulf %6, %12 : vector<2x8x1x32xf32>
    %14 = vector.broadcast %10 : vector<1x8x1x32xf32> to vector<2x8x1x32xf32>
    %15 = arith.mulf %7, %14 : vector<2x8x1x32xf32>
    %16 = arith.addf %13, %15 : vector<2x8x1x32xf32>
    %17 = vector.broadcast %11 : vector<1x8x1x32xf32> to vector<2x8x1x32xf32>
    %18 = arith.mulf %8, %17 : vector<2x8x1x32xf32>
    %19 = arith.addf %16, %18 : vector<2x8x1x32xf32>
    %c0_10 = arith.constant 0 : index
    %c0_11 = arith.constant 0 : index
    %c0_12 = arith.constant 0 : index
    %c0_13 = arith.constant 0 : index
    %20 = vector.load %arg5[%c0_10, %c0_11, %c0_12, %c0_13] : memref<2x8x1x32xf32, #tpu.memory_space<vmem>>, vector<2x8x1x32xf32>
    tpu.vector_store %arg5[%c0_10, %c0_11, %c0_12, %c0_13], %19 {strides = array<i32>} : memref<2x8x1x32xf32, #tpu.memory_space<vmem>>, vector<2x8x1x32xf32>,
    %c0_14 = arith.constant 0 : index
    %c0_15 = arith.constant 0 : index
    %c0_16 = arith.constant 0 : index
    %c0_17 = arith.constant 0 : index
    %21 = vector.load %arg3[%c0_14, %c0_15, %c0_16, %c0_17] : memref<2x8x1x32xf32, #tpu.memory_space<vmem>>, vector<2x8x1x32xf32>
    %c31_i32_18 = arith.constant 31 : i32
    %22 = tpu.dynamic_rotate %21 by %c31_i32_18 dim 3 : vector<2x8x1x32xf32>, i32 -> vector<2x8x1x32xf32>
    %c1_i32_19 = arith.constant 1 : i32
    %23 = tpu.dynamic_rotate %21 by %c1_i32_19 dim 3 : vector<2x8x1x32xf32>, i32 -> vector<2x8x1x32xf32>
    %24 = vector.shape_cast %1 : vector<8x32xf32> to vector<1x8x1x32xf32>
    %25 = vector.shape_cast %3 : vector<8x32xf32> to vector<1x8x1x32xf32>
    %26 = vector.shape_cast %5 : vector<8x32xf32> to vector<1x8x1x32xf32>
    %27 = vector.broadcast %24 : vector<1x8x1x32xf32> to vector<2x8x1x32xf32>
    %28 = arith.mulf %21, %27 : vector<2x8x1x32xf32>
    %29 = vector.broadcast %25 : vector<1x8x1x32xf32> to vector<2x8x1x32xf32>
    %30 = arith.mulf %22, %29 : vector<2x8x1x32xf32>
    %31 = arith.addf %28, %30 : vector<2x8x1x32xf32>
    %32 = vector.broadcast %26 : vector<1x8x1x32xf32> to vector<2x8x1x32xf32>
    %33 = arith.mulf %23, %32 : vector<2x8x1x32xf32>
    %34 = arith.addf %31, %33 : vector<2x8x1x32xf32>
    %c0_20 = arith.constant 0 : index
    %c0_21 = arith.constant 0 : index
    %c0_22 = arith.constant 0 : index
    %c0_23 = arith.constant 0 : index
    %35 = vector.load %arg6[%c0_20, %c0_21, %c0_22, %c0_23] : memref<2x8x1x32xf32, #tpu.memory_space<vmem>>, vector<2x8x1x32xf32>
    tpu.vector_store %arg6[%c0_20, %c0_21, %c0_22, %c0_23], %34 {strides = array<i32>} : memref<2x8x1x32xf32, #tpu.memory_space<vmem>>, vector<2x8x1x32xf32>,
    return
  }
  func.func @transform_0(%arg0: i32, %arg1: i32) -> (i32, i32, i32, i32) {
    %c0_i32 = arith.constant 0 : i32
    %c0_i32_0 = arith.constant 0 : i32
    %c0_i32_1 = arith.constant 0 : i32
    return %arg1, %arg0, %c0_i32, %c0_i32_0 : i32, i32, i32, i32
  }
  func.func @transform_1(%arg0: i32, %arg1: i32) -> (i32, i32, i32, i32) {
    %c0_i32 = arith.constant 0 : i32
    %c0_i32_0 = arith.constant 0 : i32
    %c0_i32_1 = arith.constant 0 : i32
    return %arg1, %arg0, %c0_i32, %c0_i32_0 : i32, i32, i32, i32
  }
  func.func @transform_2(%arg0: i32, %arg1: i32) -> (i32, i32, i32) {
    %c0_i32 = arith.constant 0 : i32
    %c0_i32_0 = arith.constant 0 : i32
    %c0_i32_1 = arith.constant 0 : i32
    return %c0_i32, %arg0, %c0_i32_0 : i32, i32, i32
  }
  func.func @transform_3(%arg0: i32, %arg1: i32) -> (i32, i32, i32, i32) {
    %c0_i32 = arith.constant 0 : i32
    %c0_i32_0 = arith.constant 0 : i32
    %c0_i32_1 = arith.constant 0 : i32
    return %arg1, %arg0, %c0_i32, %c0_i32_0 : i32, i32, i32, i32
  }
  func.func @transform_4(%arg0: i32, %arg1: i32) -> (i32, i32, i32, i32) {
    %c0_i32 = arith.constant 0 : i32
    %c0_i32_0 = arith.constant 0 : i32
    %c0_i32_1 = arith.constant 0 : i32
    return %arg1, %arg0, %c0_i32, %c0_i32_0 : i32, i32, i32, i32
  }
}

</mosaic_0001>

<llo_original>
// kernel: tpu_custom_call.1
$region0: #{tpu_custom_call.1}
  #allocation0 [shape = 'u32[]', space=smem, size = 0x4, offset = 0x4, fixed_abs, tag = 'smem constant byte address 0x4 - core index']
  #allocation1 [shape = 'u32[144,128]{1,0:T(1,128)}', space=vmem, size = 0x12000, scoped, tag = 'internal scratch']
  %s0 = inlined_call_operand.hbm [shape: f32[2,8,1,32], index: 0, kind: input, shape index: {}]
  %s1 = inlined_call_operand.hbm [shape: f32[2,8,1,32], index: 1, kind: input, shape index: {}]
  %s2 = inlined_call_operand.hbm [shape: f32[3,8,32], index: 2, kind: input, shape index: {}]
  %s3 = inlined_call_operand.hbm [shape: f32[2,8,1,32], index: 3, kind: output, shape index: {0}]
  %s4 = inlined_call_operand.hbm [shape: f32[2,8,1,32], index: 4, kind: output, shape index: {1}]
  %5 = xla_tuple %s3, %s4
  %s6 = sld [smem:[#allocation0]]
  $region42: #{tpu_custom_call.1} parent=0
    _
  %s8 = ssub.s32 1, %s6
  %s9 = scalar_select 0, %s8, %s6
  $region1: #{tpu_custom_call.1} parent=0
    #allocation2 [shape = 'u8[8192]{0}', space=vmem, size = 0x2000, scoped, tag = 'input window, operand 0, single buffered']
    #allocation3 [shape = 's32[1]{0}', space=sflag, size = 0x4, scoped, tag = 'scoped memory for tpu_custom_call.1']
    #allocation4 [shape = 's32[1]{0}', space=sflag, size = 0x4, scoped, tag = 'scoped memory for tpu_custom_call.1']
    #allocation5 [shape = 'u8[8192]{0}', space=vmem, size = 0x2000, scoped, tag = 'input window, operand 1, single buffered']
    #allocation6 [shape = 's32[1]{0}', space=sflag, size = 0x4, scoped, tag = 'scoped memory for tpu_custom_call.1']
    #allocation7 [shape = 'u8[12288]{0}', space=vmem, size = 0x3000, scoped, tag = 'input window, operand 2, single buffered']
    #allocation8 [shape = 'u8[8192]{0}', space=vmem, size = 0x2000, scoped, tag = 'output window, operand 0, single buffered']
    #allocation9 [shape = 'u8[8192]{0}', space=vmem, size = 0x2000, scoped, tag = 'output window, operand 1, single buffered']
    #allocation10 [shape = 's32[1]{0}', space=sflag, size = 0x4, scoped, tag = 'scoped memory for tpu_custom_call.1']
    %10 = vsyncpa [#allocation3], 0
    %11 = vsyncpa [#allocation6], 0
    %12 = vsyncpa [#allocation4], 0
    %13 = vsyncpa [#allocation10], 0
    // Predicated region
    $region2: #{tpu_custom_call.1} parent=1 // pred_check
      _
    $region3: #{tpu_custom_call.1} parent=1 // pred_check_branch
      %15 = sbr.rel (0) target = $region5
    $region4: #{tpu_custom_call.1} parent=1 // pred_region
      %s17 = ssub.s32 256, 256
      %18 = vsyncadd [#allocation3], %s17
      %s19 = sshll.u32 [#allocation2], 4
      %s20 = int_to_ptr.vmem [resolvable:$true] %s19
      %25 = dma.hbm_to_vmem [thread:$0]  %s0, 256, %s20, [#allocation3], 16, 16, 1
    $region5: #{tpu_custom_call.1} parent=1 // pred_fallthru
      _
    // Predicated region
    $region6: #{tpu_custom_call.1} parent=1 // pred_check
      _
    $region7: #{tpu_custom_call.1} parent=1 // pred_check_branch
      %27 = sbr.rel (0) target = $region9
    $region8: #{tpu_custom_call.1} parent=1 // pred_region
      %s29 = ssub.s32 256, 256
      %30 = vsyncadd [#allocation6], %s29
      %s31 = sshll.u32 [#allocation5], 4
      %s32 = int_to_ptr.vmem [resolvable:$true] %s31
      %37 = dma.hbm_to_vmem [thread:$0]  %s1, 256, %s32, [#allocation6], 16, 16, 1
    $region9: #{tpu_custom_call.1} parent=1 // pred_fallthru
      _
    // Predicated region
    $region10: #{tpu_custom_call.1} parent=1 // pred_check
      _
    $region11: #{tpu_custom_call.1} parent=1 // pred_check_branch
      %39 = sbr.rel (0) target = $region13
    $region12: #{tpu_custom_call.1} parent=1 // pred_region
      %s41 = ssub.s32 384, 384
      %42 = vsyncadd [#allocation6], %s41
      %s43 = sshll.u32 [#allocation7], 4
      %s44 = int_to_ptr.vmem [resolvable:$true] %s43
      %49 = dma.hbm_to_vmem [thread:$0]  %s2, 384, %s44, [#allocation6], 128, 128, 8
    $region13: #{tpu_custom_call.1} parent=1 // pred_fallthru
      _
    // Predicated region
    $region14: #{tpu_custom_call.1} parent=1 // pred_check
      _
    $region15: #{tpu_custom_call.1} parent=1 // pred_check_branch
      %51 = sbr.rel (0) target = $region17
    $region16: #{tpu_custom_call.1} parent=1 // pred_region
      %52 = dma.done [#allocation3], 256
    $region17: #{tpu_custom_call.1} parent=1 // pred_fallthru
      _
    // Predicated region
    $region18: #{tpu_custom_call.1} parent=1 // pred_check
      _
    $region19: #{tpu_custom_call.1} parent=1 // pred_check_branch
      %54 = sbr.rel (0) target = $region21
    $region20: #{tpu_custom_call.1} parent=1 // pred_region
      %55 = dma.done [#allocation6], 256
    $region21: #{tpu_custom_call.1} parent=1 // pred_fallthru
      _
    // Predicated region
    $region22: #{tpu_custom_call.1} parent=1 // pred_check
      _
    $region23: #{tpu_custom_call.1} parent=1 // pred_check_branch
      %57 = sbr.rel (0) target = $region25
    $region24: #{tpu_custom_call.1} parent=1 // pred_region
      %58 = dma.done [#allocation6], 384
    $region25: #{tpu_custom_call.1} parent=1 // pred_fallthru
      _
    %v59 = vld [vmem:[#allocation7] sm:$0xff]
    %s60 = scalar_lea.vmem [#allocation7], 8
    %v61 = vld [vmem:[%s60] sm:$0xff]
    %s62 = scalar_lea.vmem [#allocation7], 16
    %v63 = vld [vmem:[%s62] sm:$0xff]
    %v64 = vld [vmem:[#allocation2] sm:$0x1]
    %v65 = vld [vmem:[#allocation2 + $0x1] sm:$0x1]
    %v66 = vld [vmem:[#allocation2 + $0x2] sm:$0x1]
    %v67 = vld [vmem:[#allocation2 + $0x3] sm:$0x1]
    %v68 = vld [vmem:[#allocation2 + $0x4] sm:$0x1]
    %v69 = vld [vmem:[#allocation2 + $0x5] sm:$0x1]
    %v70 = vld [vmem:[#allocation2 + $0x6] sm:$0x1]
    %v71 = vld [vmem:[#allocation2 + $0x7] sm:$0x1]
    %v72 = vld [vmem:[#allocation2 + $0x8] sm:$0x1]
    %v73 = vld [vmem:[#allocation2 + $0x9] sm:$0x1]
    %v74 = vld [vmem:[#allocation2 + $0xa] sm:$0x1]
    %v75 = vld [vmem:[#allocation2 + $0xb] sm:$0x1]
    %v76 = vld [vmem:[#allocation2 + $0xc] sm:$0x1]
    %v77 = vld [vmem:[#allocation2 + $0xd] sm:$0x1]
    %v78 = vld [vmem:[#allocation2 + $0xe] sm:$0x1]
    %v79 = vld [vmem:[#allocation2 + $0xf] sm:$0x1]
    %vm80 = vcmask 1047808
    %81 = vrot.lane.b32.xlu0 %v64, 32
    %v82 = vpop.permute.xlu0 %81
    %v83 = vsel %vm80, %v82, %v64
    %84 = vrot.lane.b32.xlu0 %v65, 32
    %v85 = vpop.permute.xlu0 %84
    %v86 = vsel %vm80, %v85, %v65
    %87 = vrot.lane.b32.xlu0 %v66, 32
    %v88 = vpop.permute.xlu0 %87
    %v89 = vsel %vm80, %v88, %v66
    %90 = vrot.lane.b32.xlu0 %v67, 32
    %v91 = vpop.permute.xlu0 %90
    %v92 = vsel %vm80, %v91, %v67
    %93 = vrot.lane.b32.xlu0 %v68, 32
    %v94 = vpop.permute.xlu0 %93
    %v95 = vsel %vm80, %v94, %v68
    %96 = vrot.lane.b32.xlu0 %v69, 32
    %v97 = vpop.permute.xlu0 %96
    %v98 = vsel %vm80, %v97, %v69
    %99 = vrot.lane.b32.xlu0 %v70, 32
    %v100 = vpop.permute.xlu0 %99
    %v101 = vsel %vm80, %v100, %v70
    %102 = vrot.lane.b32.xlu0 %v71, 32
    %v103 = vpop.permute.xlu0 %102
    %v104 = vsel %vm80, %v103, %v71
    %105 = vrot.lane.b32.xlu0 %v72, 32
    %v106 = vpop.permute.xlu0 %105
    %v107 = vsel %vm80, %v106, %v72
    %108 = vrot.lane.b32.xlu0 %v73, 32
    %v109 = vpop.permute.xlu0 %108
    %v110 = vsel %vm80, %v109, %v73
    %111 = vrot.lane.b32.xlu0 %v74, 32
    %v112 = vpop.permute.xlu0 %111
    %v113 = vsel %vm80, %v112, %v74
    %114 = vrot.lane.b32.xlu0 %v75, 32
    %v115 = vpop.permute.xlu0 %114
    %v116 = vsel %vm80, %v115, %v75
    %117 = vrot.lane.b32.xlu0 %v76, 32
    %v118 = vpop.permute.xlu0 %117
    %v119 = vsel %vm80, %v118, %v76
    %120 = vrot.lane.b32.xlu0 %v77, 32
    %v121 = vpop.permute.xlu0 %120
    %v122 = vsel %vm80, %v121, %v77
    %123 = vrot.lane.b32.xlu0 %v78, 32
    %v124 = vpop.permute.xlu0 %123
    %v125 = vsel %vm80, %v124, %v78
    %126 = vrot.lane.b32.xlu0 %v79, 32
    %v127 = vpop.permute.xlu0 %126
    %v128 = vsel %vm80, %v127, %v79
    %129 = vrot.lane.b32.xlu0 %v83, 32
    %v130 = vpop.permute.xlu0 %129
    %131 = vrot.lane.b32.xlu0 %v86, 32
    %v132 = vpop.permute.xlu0 %131
    %133 = vrot.lane.b32.xlu0 %v89, 32
    %v134 = vpop.permute.xlu0 %133
    %135 = vrot.lane.b32.xlu0 %v92, 32
    %v136 = vpop.permute.xlu0 %135
    %137 = vrot.lane.b32.xlu0 %v95, 32
    %v138 = vpop.permute.xlu0 %137
    %139 = vrot.lane.b32.xlu0 %v98, 32
    %v140 = vpop.permute.xlu0 %139
    %141 = vrot.lane.b32.xlu0 %v101, 32
    %v142 = vpop.permute.xlu0 %141
    %143 = vrot.lane.b32.xlu0 %v104, 32
    %v144 = vpop.permute.xlu0 %143
    %145 = vrot.lane.b32.xlu0 %v107, 32
    %v146 = vpop.permute.xlu0 %145
    %147 = vrot.lane.b32.xlu0 %v110, 32
    %v148 = vpop.permute.xlu0 %147
    %149 = vrot.lane.b32.xlu0 %v113, 32
    %v150 = vpop.permute.xlu0 %149
    %151 = vrot.lane.b32.xlu0 %v116, 32
    %v152 = vpop.permute.xlu0 %151
    %153 = vrot.lane.b32.xlu0 %v119, 32
    %v154 = vpop.permute.xlu0 %153
    %155 = vrot.lane.b32.xlu0 %v122, 32
    %v156 = vpop.permute.xlu0 %155
    %157 = vrot.lane.b32.xlu0 %v125, 32
    %v158 = vpop.permute.xlu0 %157
    %159 = vrot.lane.b32.xlu0 %v128, 32
    %v160 = vpop.permute.xlu0 %159
    %v161 = vsel %vm80, %v130, %v64
    %v162 = vsel %vm80, %v132, %v65
    %v163 = vsel %vm80, %v134, %v66
    %v164 = vsel %vm80, %v136, %v67
    %v165 = vsel %vm80, %v138, %v68
    %v166 = vsel %vm80, %v140, %v69
    %v167 = vsel %vm80, %v142, %v70
    %v168 = vsel %vm80, %v144, %v71
    %v169 = vsel %vm80, %v146, %v72
    %v170 = vsel %vm80, %v148, %v73
    %v171 = vsel %vm80, %v150, %v74
    %v172 = vsel %vm80, %v152, %v75
    %v173 = vsel %vm80, %v154, %v76
    %v174 = vsel %vm80, %v156, %v77
    %v175 = vsel %vm80, %v158, %v78
    %v176 = vsel %vm80, %v160, %v79
    %v178 = vcombine.high %v59, %v59
    %v180 = vunpack.c.l.s4 1966171168
    %v181 = vunpack.c.0.s8 %v180
    %v182 = vlaneseq
    %v183 = vshrl.u32 %v182, 7
    %v184 = vsub.s32 %v181, %v183
    %v185 = vrot.slane %v59, %v184
    %v187 = vunpack.c.l.s4 1966171168
    %v188 = vunpack.c.0.s8 %v187
    %v189 = vlaneseq
    %v190 = vshrl.u32 %v189, 7
    %v191 = vsub.s32 %v188, %v190
    %v192 = vrot.slane %v178, %v191
    %v193 = vcombine.high %v185, %v185
    %v194 = vcombine.high %v192, %v192
    %v196 = vunpack.c.l.s4 1966171168
    %v197 = vunpack.c.0.s8 %v196
    %v198 = vlaneseq
    %v199 = vshrl.u32 %v198, 7
    %v200 = vsub.s32 %v197, %v199
    %v201 = vrot.slane %v185, %v200
    %v203 = vunpack.c.l.s4 1966171168
    %v204 = vunpack.c.0.s8 %v203
    %v205 = vlaneseq
    %v206 = vshrl.u32 %v205, 7
    %v207 = vsub.s32 %v204, %v206
    %v208 = vrot.slane %v192, %v207
    %v210 = vunpack.c.l.s4 1966171168
    %v211 = vunpack.c.0.s8 %v210
    %v212 = vlaneseq
    %v213 = vshrl.u32 %v212, 7
    %v214 = vsub.s32 %v211, %v213
    %v215 = vrot.slane %v193, %v214
    %v217 = vunpack.c.l.s4 1966171168
    %v218 = vunpack.c.0.s8 %v217
    %v219 = vlaneseq
    %v220 = vshrl.u32 %v219, 7
    %v221 = vsub.s32 %v218, %v220
    %v222 = vrot.slane %v194, %v221
    %v223 = vcombine.high %v201, %v201
    %v224 = vcombine.high %v208, %v208
    %v225 = vcombine.high %v215, %v215
    %v226 = vcombine.high %v222, %v222
    %v236 = vcombine.high %v61, %v61
    %v238 = vunpack.c.l.s4 1966171168
    %v239 = vunpack.c.0.s8 %v238
    %v240 = vlaneseq
    %v241 = vshrl.u32 %v240, 7
    %v242 = vsub.s32 %v239, %v241
    %v243 = vrot.slane %v61, %v242
    %v245 = vunpack.c.l.s4 1966171168
    %v246 = vunpack.c.0.s8 %v245
    %v247 = vlaneseq
    %v248 = vshrl.u32 %v247, 7
    %v249 = vsub.s32 %v246, %v248
    %v250 = vrot.slane %v236, %v249
    %v251 = vcombine.high %v243, %v243
    %v252 = vcombine.high %v250, %v250
    %v254 = vunpack.c.l.s4 1966171168
    %v255 = vunpack.c.0.s8 %v254
    %v256 = vlaneseq
    %v257 = vshrl.u32 %v256, 7
    %v258 = vsub.s32 %v255, %v257
    %v259 = vrot.slane %v243, %v258
    %v261 = vunpack.c.l.s4 1966171168
    %v262 = vunpack.c.0.s8 %v261
    %v263 = vlaneseq
    %v264 = vshrl.u32 %v263, 7
    %v265 = vsub.s32 %v262, %v264
    %v266 = vrot.slane %v250, %v265
    %v268 = vunpack.c.l.s4 1966171168
    %v269 = vunpack.c.0.s8 %v268
    %v270 = vlaneseq
    %v271 = vshrl.u32 %v270, 7
    %v272 = vsub.s32 %v269, %v271
    %v273 = vrot.slane %v251, %v272
    %v275 = vunpack.c.l.s4 1966171168
    %v276 = vunpack.c.0.s8 %v275
    %v277 = vlaneseq
    %v278 = vshrl.u32 %v277, 7
    %v279 = vsub.s32 %v276, %v278
    %v280 = vrot.slane %v252, %v279
    %v281 = vcombine.high %v259, %v259
    %v282 = vcombine.high %v266, %v266
    %v283 = vcombine.high %v273, %v273
    %v284 = vcombine.high %v280, %v280
    %v286 = vcombine.high %v63, %v63
    %v288 = vunpack.c.l.s4 1966171168
    %v289 = vunpack.c.0.s8 %v288
    %v290 = vlaneseq
    %v291 = vshrl.u32 %v290, 7
    %v292 = vsub.s32 %v289, %v291
    %v293 = vrot.slane %v63, %v292
    %v295 = vunpack.c.l.s4 1966171168
    %v296 = vunpack.c.0.s8 %v295
    %v297 = vlaneseq
    %v298 = vshrl.u32 %v297, 7
    %v299 = vsub.s32 %v296, %v298
    %v300 = vrot.slane %v286, %v299
    %v301 = vcombine.high %v293, %v293
    %v302 = vcombine.high %v300, %v300
    %v304 = vunpack.c.l.s4 1966171168
    %v305 = vunpack.c.0.s8 %v304
    %v306 = vlaneseq
    %v307 = vshrl.u32 %v306, 7
    %v308 = vsub.s32 %v305, %v307
    %v309 = vrot.slane %v293, %v308
    %v311 = vunpack.c.l.s4 1966171168
    %v312 = vunpack.c.0.s8 %v311
    %v313 = vlaneseq
    %v314 = vshrl.u32 %v313, 7
    %v315 = vsub.s32 %v312, %v314
    %v316 = vrot.slane %v300, %v315
    %v318 = vunpack.c.l.s4 1966171168
    %v319 = vunpack.c.0.s8 %v318
    %v320 = vlaneseq
    %v321 = vshrl.u32 %v320, 7
    %v322 = vsub.s32 %v319, %v321
    %v323 = vrot.slane %v301, %v322
    %v325 = vunpack.c.l.s4 1966171168
    %v326 = vunpack.c.0.s8 %v325
    %v327 = vlaneseq
    %v328 = vshrl.u32 %v327, 7
    %v329 = vsub.s32 %v326, %v328
    %v330 = vrot.slane %v302, %v329
    %v331 = vcombine.high %v309, %v309
    %v332 = vcombine.high %v316, %v316
    %v333 = vcombine.high %v323, %v323
    %v334 = vcombine.high %v330, %v330
    %v335 = vmul.f32 %v64, %v201
    %v336 = vmul.f32 %v65, %v215
    %v337 = vmul.f32 %v66, %v223
    %v338 = vmul.f32 %v67, %v225
    %v339 = vmul.f32 %v68, %v208
    %v340 = vmul.f32 %v69, %v222
    %v341 = vmul.f32 %v70, %v224
    %v342 = vmul.f32 %v71, %v226
    %v343 = vmul.f32 %v72, %v201
    %v344 = vmul.f32 %v73, %v215
    %v345 = vmul.f32 %v74, %v223
    %v346 = vmul.f32 %v75, %v225
    %v347 = vmul.f32 %v76, %v208
    %v348 = vmul.f32 %v77, %v222
    %v349 = vmul.f32 %v78, %v224
    %v350 = vmul.f32 %v79, %v226
    %v351 = vlaneseq
    %v352 = vshrl.u32 %v351, 7
    %v353 = vsub.s32 0, %v352
    %v354 = vrot.slane %v259, %v353
    %v355 = vlaneseq
    %v356 = vshrl.u32 %v355, 7
    %v357 = vsub.s32 0, %v356
    %v358 = vrot.slane %v273, %v357
    %v359 = vlaneseq
    %v360 = vshrl.u32 %v359, 7
    %v361 = vsub.s32 0, %v360
    %v362 = vrot.slane %v281, %v361
    %v363 = vlaneseq
    %v364 = vshrl.u32 %v363, 7
    %v365 = vsub.s32 0, %v364
    %v366 = vrot.slane %v283, %v365
    %v367 = vlaneseq
    %v368 = vshrl.u32 %v367, 7
    %v369 = vsub.s32 0, %v368
    %v370 = vrot.slane %v266, %v369
    %v371 = vlaneseq
    %v372 = vshrl.u32 %v371, 7
    %v373 = vsub.s32 0, %v372
    %v374 = vrot.slane %v280, %v373
    %v375 = vlaneseq
    %v376 = vshrl.u32 %v375, 7
    %v377 = vsub.s32 0, %v376
    %v378 = vrot.slane %v282, %v377
    %v379 = vlaneseq
    %v380 = vshrl.u32 %v379, 7
    %v381 = vsub.s32 0, %v380
    %v382 = vrot.slane %v284, %v381
    %383 = vrot.lane.b32.xlu0 %v354, 1
    %v384 = vpop.permute.xlu0 %383
    %385 = vrot.lane.b32.xlu0 %v358, 1
    %v386 = vpop.permute.xlu0 %385
    %387 = vrot.lane.b32.xlu0 %v362, 1
    %v388 = vpop.permute.xlu0 %387
    %389 = vrot.lane.b32.xlu0 %v366, 1
    %v390 = vpop.permute.xlu0 %389
    %391 = vrot.lane.b32.xlu0 %v370, 1
    %v392 = vpop.permute.xlu0 %391
    %393 = vrot.lane.b32.xlu0 %v374, 1
    %v394 = vpop.permute.xlu0 %393
    %395 = vrot.lane.b32.xlu0 %v378, 1
    %v396 = vpop.permute.xlu0 %395
    %397 = vrot.lane.b32.xlu0 %v382, 1
    %v398 = vpop.permute.xlu0 %397
    %v407 = vmul.f32 %v161, %v384
    %v408 = vmul.f32 %v162, %v386
    %v409 = vmul.f32 %v163, %v388
    %v410 = vmul.f32 %v164, %v390
    %v411 = vmul.f32 %v165, %v392
    %v412 = vmul.f32 %v166, %v394
    %v413 = vmul.f32 %v167, %v396
    %v414 = vmul.f32 %v168, %v398
    %v415 = vmul.f32 %v169, %v384
    %v416 = vmul.f32 %v170, %v386
    %v417 = vmul.f32 %v171, %v388
    %v418 = vmul.f32 %v172, %v390
    %v419 = vmul.f32 %v173, %v392
    %v420 = vmul.f32 %v174, %v394
    %v421 = vmul.f32 %v175, %v396
    %v422 = vmul.f32 %v176, %v398
    %v440 = vunpack.c.l.s4 1966171168
    %v441 = vunpack.c.0.s8 %v440
    %v442 = vlaneseq
    %v443 = vshrl.u32 %v442, 7
    %v444 = vsub.s32 %v441, %v443
    %v445 = vrot.slane %v407, %v444
    %v447 = vunpack.c.l.s4 1966171168
    %v448 = vunpack.c.0.s8 %v447
    %v449 = vlaneseq
    %v450 = vshrl.u32 %v449, 7
    %v451 = vsub.s32 %v448, %v450
    %v452 = vrot.slane %v445, %v451
    %v454 = vunpack.c.l.s4 1966171168
    %v455 = vunpack.c.0.s8 %v454
    %v456 = vlaneseq
    %v457 = vshrl.u32 %v456, 7
    %v458 = vsub.s32 %v455, %v457
    %v459 = vrot.slane %v408, %v458
    %v461 = vunpack.c.l.s4 1966171168
    %v462 = vunpack.c.0.s8 %v461
    %v463 = vlaneseq
    %v464 = vshrl.u32 %v463, 7
    %v465 = vsub.s32 %v462, %v464
    %v466 = vrot.slane %v459, %v465
    %v468 = vunpack.c.l.s4 1966171168
    %v469 = vunpack.c.0.s8 %v468
    %v470 = vlaneseq
    %v471 = vshrl.u32 %v470, 7
    %v472 = vsub.s32 %v469, %v471
    %v473 = vrot.slane %v409, %v472
    %v475 = vunpack.c.l.s4 1966171168
    %v476 = vunpack.c.0.s8 %v475
    %v477 = vlaneseq
    %v478 = vshrl.u32 %v477, 7
    %v479 = vsub.s32 %v476, %v478
    %v480 = vrot.slane %v473, %v479
    %v482 = vunpack.c.l.s4 1966171168
    %v483 = vunpack.c.0.s8 %v482
    %v484 = vlaneseq
    %v485 = vshrl.u32 %v484, 7
    %v486 = vsub.s32 %v483, %v485
    %v487 = vrot.slane %v410, %v486
    %v489 = vunpack.c.l.s4 1966171168
    %v490 = vunpack.c.0.s8 %v489
    %v491 = vlaneseq
    %v492 = vshrl.u32 %v491, 7
    %v493 = vsub.s32 %v490, %v492
    %v494 = vrot.slane %v487, %v493
    %v496 = vunpack.c.l.s4 1966171168
    %v497 = vunpack.c.0.s8 %v496
    %v498 = vlaneseq
    %v499 = vshrl.u32 %v498, 7
    %v500 = vsub.s32 %v497, %v499
    %v501 = vrot.slane %v411, %v500
    %v503 = vunpack.c.l.s4 1966171168
    %v504 = vunpack.c.0.s8 %v503
    %v505 = vlaneseq
    %v506 = vshrl.u32 %v505, 7
    %v507 = vsub.s32 %v504, %v506
    %v508 = vrot.slane %v501, %v507
    %v510 = vunpack.c.l.s4 1966171168
    %v511 = vunpack.c.0.s8 %v510
    %v512 = vlaneseq
    %v513 = vshrl.u32 %v512, 7
    %v514 = vsub.s32 %v511, %v513
    %v515 = vrot.slane %v412, %v514
    %v517 = vunpack.c.l.s4 1966171168
    %v518 = vunpack.c.0.s8 %v517
    %v519 = vlaneseq
    %v520 = vshrl.u32 %v519, 7
    %v521 = vsub.s32 %v518, %v520
    %v522 = vrot.slane %v515, %v521
    %v524 = vunpack.c.l.s4 1966171168
    %v525 = vunpack.c.0.s8 %v524
    %v526 = vlaneseq
    %v527 = vshrl.u32 %v526, 7
    %v528 = vsub.s32 %v525, %v527
    %v529 = vrot.slane %v413, %v528
    %v531 = vunpack.c.l.s4 1966171168
    %v532 = vunpack.c.0.s8 %v531
    %v533 = vlaneseq
    %v534 = vshrl.u32 %v533, 7
    %v535 = vsub.s32 %v532, %v534
    %v536 = vrot.slane %v529, %v535
    %v538 = vunpack.c.l.s4 1966171168
    %v539 = vunpack.c.0.s8 %v538
    %v540 = vlaneseq
    %v541 = vshrl.u32 %v540, 7
    %v542 = vsub.s32 %v539, %v541
    %v543 = vrot.slane %v414, %v542
    %v545 = vunpack.c.l.s4 1966171168
    %v546 = vunpack.c.0.s8 %v545
    %v547 = vlaneseq
    %v548 = vshrl.u32 %v547, 7
    %v549 = vsub.s32 %v546, %v548
    %v550 = vrot.slane %v543, %v549
    %v552 = vunpack.c.l.s4 1966171168
    %v553 = vunpack.c.0.s8 %v552
    %v554 = vlaneseq
    %v555 = vshrl.u32 %v554, 7
    %v556 = vsub.s32 %v553, %v555
    %v557 = vrot.slane %v415, %v556
    %v559 = vunpack.c.l.s4 1966171168
    %v560 = vunpack.c.0.s8 %v559
    %v561 = vlaneseq
    %v562 = vshrl.u32 %v561, 7
    %v563 = vsub.s32 %v560, %v562
    %v564 = vrot.slane %v557, %v563
    %v566 = vunpack.c.l.s4 1966171168
    %v567 = vunpack.c.0.s8 %v566
    %v568 = vlaneseq
    %v569 = vshrl.u32 %v568, 7
    %v570 = vsub.s32 %v567, %v569
    %v571 = vrot.slane %v416, %v570
    %v573 = vunpack.c.l.s4 1966171168
    %v574 = vunpack.c.0.s8 %v573
    %v575 = vlaneseq
    %v576 = vshrl.u32 %v575, 7
    %v577 = vsub.s32 %v574, %v576
    %v578 = vrot.slane %v571, %v577
    %v580 = vunpack.c.l.s4 1966171168
    %v581 = vunpack.c.0.s8 %v580
    %v582 = vlaneseq
    %v583 = vshrl.u32 %v582, 7
    %v584 = vsub.s32 %v581, %v583
    %v585 = vrot.slane %v417, %v584
    %v587 = vunpack.c.l.s4 1966171168
    %v588 = vunpack.c.0.s8 %v587
    %v589 = vlaneseq
    %v590 = vshrl.u32 %v589, 7
    %v591 = vsub.s32 %v588, %v590
    %v592 = vrot.slane %v585, %v591
    %v594 = vunpack.c.l.s4 1966171168
    %v595 = vunpack.c.0.s8 %v594
    %v596 = vlaneseq
    %v597 = vshrl.u32 %v596, 7
    %v598 = vsub.s32 %v595, %v597
    %v599 = vrot.slane %v418, %v598
    %v601 = vunpack.c.l.s4 1966171168
    %v602 = vunpack.c.0.s8 %v601
    %v603 = vlaneseq
    %v604 = vshrl.u32 %v603, 7
    %v605 = vsub.s32 %v602, %v604
    %v606 = vrot.slane %v599, %v605
    %v608 = vunpack.c.l.s4 1966171168
    %v609 = vunpack.c.0.s8 %v608
    %v610 = vlaneseq
    %v611 = vshrl.u32 %v610, 7
    %v612 = vsub.s32 %v609, %v611
    %v613 = vrot.slane %v419, %v612
    %v615 = vunpack.c.l.s4 1966171168
    %v616 = vunpack.c.0.s8 %v615
    %v617 = vlaneseq
    %v618 = vshrl.u32 %v617, 7
    %v619 = vsub.s32 %v616, %v618
    %v620 = vrot.slane %v613, %v619
    %v622 = vunpack.c.l.s4 1966171168
    %v623 = vunpack.c.0.s8 %v622
    %v624 = vlaneseq
    %v625 = vshrl.u32 %v624, 7
    %v626 = vsub.s32 %v623, %v625
    %v627 = vrot.slane %v420, %v626
    %v629 = vunpack.c.l.s4 1966171168
    %v630 = vunpack.c.0.s8 %v629
    %v631 = vlaneseq
    %v632 = vshrl.u32 %v631, 7
    %v633 = vsub.s32 %v630, %v632
    %v634 = vrot.slane %v627, %v633
    %v636 = vunpack.c.l.s4 1966171168
    %v637 = vunpack.c.0.s8 %v636
    %v638 = vlaneseq
    %v639 = vshrl.u32 %v638, 7
    %v640 = vsub.s32 %v637, %v639
    %v641 = vrot.slane %v421, %v640
    %v643 = vunpack.c.l.s4 1966171168
    %v644 = vunpack.c.0.s8 %v643
    %v645 = vlaneseq
    %v646 = vshrl.u32 %v645, 7
    %v647 = vsub.s32 %v644, %v646
    %v648 = vrot.slane %v641, %v647
    %v650 = vunpack.c.l.s4 1966171168
    %v651 = vunpack.c.0.s8 %v650
    %v652 = vlaneseq
    %v653 = vshrl.u32 %v652, 7
    %v654 = vsub.s32 %v651, %v653
    %v655 = vrot.slane %v422, %v654
    %v657 = vunpack.c.l.s4 1966171168
    %v658 = vunpack.c.0.s8 %v657
    %v659 = vlaneseq
    %v660 = vshrl.u32 %v659, 7
    %v661 = vsub.s32 %v658, %v660
    %v662 = vrot.slane %v655, %v661
    %663 = vrot.lane.b32.xlu0 %v452, 127
    %v664 = vpop.permute.xlu0 %663
    %665 = vrot.lane.b32.xlu0 %v466, 127
    %v666 = vpop.permute.xlu0 %665
    %667 = vrot.lane.b32.xlu0 %v480, 127
    %v668 = vpop.permute.xlu0 %667
    %669 = vrot.lane.b32.xlu0 %v494, 127
    %v670 = vpop.permute.xlu0 %669
    %671 = vrot.lane.b32.xlu0 %v508, 127
    %v672 = vpop.permute.xlu0 %671
    %673 = vrot.lane.b32.xlu0 %v522, 127
    %v674 = vpop.permute.xlu0 %673
    %675 = vrot.lane.b32.xlu0 %v536, 127
    %v676 = vpop.permute.xlu0 %675
    %677 = vrot.lane.b32.xlu0 %v550, 127
    %v678 = vpop.permute.xlu0 %677
    %679 = vrot.lane.b32.xlu0 %v564, 127
    %v680 = vpop.permute.xlu0 %679
    %681 = vrot.lane.b32.xlu0 %v578, 127
    %v682 = vpop.permute.xlu0 %681
    %683 = vrot.lane.b32.xlu0 %v592, 127
    %v684 = vpop.permute.xlu0 %683
    %685 = vrot.lane.b32.xlu0 %v606, 127
    %v686 = vpop.permute.xlu0 %685
    %687 = vrot.lane.b32.xlu0 %v620, 127
    %v688 = vpop.permute.xlu0 %687
    %689 = vrot.lane.b32.xlu0 %v634, 127
    %v690 = vpop.permute.xlu0 %689
    %691 = vrot.lane.b32.xlu0 %v648, 127
    %v692 = vpop.permute.xlu0 %691
    %693 = vrot.lane.b32.xlu0 %v662, 127
    %v694 = vpop.permute.xlu0 %693
    %v711 = vadd.f32 %v335, %v664
    %v712 = vadd.f32 %v336, %v666
    %v713 = vadd.f32 %v337, %v668
    %v714 = vadd.f32 %v338, %v670
    %v715 = vadd.f32 %v339, %v672
    %v716 = vadd.f32 %v340, %v674
    %v717 = vadd.f32 %v341, %v676
    %v718 = vadd.f32 %v342, %v678
    %v719 = vadd.f32 %v343, %v680
    %v720 = vadd.f32 %v344, %v682
    %v721 = vadd.f32 %v345, %v684
    %v722 = vadd.f32 %v346, %v686
    %v723 = vadd.f32 %v347, %v688
    %v724 = vadd.f32 %v348, %v690
    %v725 = vadd.f32 %v349, %v692
    %v726 = vadd.f32 %v350, %v694
    %v727 = vlaneseq
    %v728 = vshrl.u32 %v727, 7
    %v729 = vsub.s32 0, %v728
    %v730 = vrot.slane %v309, %v729
    %v731 = vlaneseq
    %v732 = vshrl.u32 %v731, 7
    %v733 = vsub.s32 0, %v732
    %v734 = vrot.slane %v323, %v733
    %v735 = vlaneseq
    %v736 = vshrl.u32 %v735, 7
    %v737 = vsub.s32 0, %v736
    %v738 = vrot.slane %v331, %v737
    %v739 = vlaneseq
    %v740 = vshrl.u32 %v739, 7
    %v741 = vsub.s32 0, %v740
    %v742 = vrot.slane %v333, %v741
    %v743 = vlaneseq
    %v744 = vshrl.u32 %v743, 7
    %v745 = vsub.s32 0, %v744
    %v746 = vrot.slane %v316, %v745
    %v747 = vlaneseq
    %v748 = vshrl.u32 %v747, 7
    %v749 = vsub.s32 0, %v748
    %v750 = vrot.slane %v330, %v749
    %v751 = vlaneseq
    %v752 = vshrl.u32 %v751, 7
    %v753 = vsub.s32 0, %v752
    %v754 = vrot.slane %v332, %v753
    %v755 = vlaneseq
    %v756 = vshrl.u32 %v755, 7
    %v757 = vsub.s32 0, %v756
    %v758 = vrot.slane %v334, %v757
    %759 = vrot.lane.b32.xlu0 %v730, 31
    %v760 = vpop.permute.xlu0 %759
    %761 = vrot.lane.b32.xlu0 %v734, 31
    %v762 = vpop.permute.xlu0 %761
    %763 = vrot.lane.b32.xlu0 %v738, 31
    %v764 = vpop.permute.xlu0 %763
    %765 = vrot.lane.b32.xlu0 %v742, 31
    %v766 = vpop.permute.xlu0 %765
    %767 = vrot.lane.b32.xlu0 %v746, 31
    %v768 = vpop.permute.xlu0 %767
    %769 = vrot.lane.b32.xlu0 %v750, 31
    %v770 = vpop.permute.xlu0 %769
    %771 = vrot.lane.b32.xlu0 %v754, 31
    %v772 = vpop.permute.xlu0 %771
    %773 = vrot.lane.b32.xlu0 %v758, 31
    %v774 = vpop.permute.xlu0 %773
    %v783 = vmul.f32 %v161, %v760
    %v784 = vmul.f32 %v162, %v762
    %v785 = vmul.f32 %v163, %v764
    %v786 = vmul.f32 %v164, %v766
    %v787 = vmul.f32 %v165, %v768
    %v788 = vmul.f32 %v166, %v770
    %v789 = vmul.f32 %v167, %v772
    %v790 = vmul.f32 %v168, %v774
    %v791 = vmul.f32 %v169, %v760
    %v792 = vmul.f32 %v170, %v762
    %v793 = vmul.f32 %v171, %v764
    %v794 = vmul.f32 %v172, %v766
    %v795 = vmul.f32 %v173, %v768
    %v796 = vmul.f32 %v174, %v770
    %v797 = vmul.f32 %v175, %v772
    %v798 = vmul.f32 %v176, %v774
    %v816 = vunpack.c.l.s4 1966171168
    %v817 = vunpack.c.0.s8 %v816
    %v818 = vlaneseq
    %v819 = vshrl.u32 %v818, 7
    %v820 = vsub.s32 %v817, %v819
    %v821 = vrot.slane %v783, %v820
    %v823 = vunpack.c.l.s4 1966171168
    %v824 = vunpack.c.0.s8 %v823
    %v825 = vlaneseq
    %v826 = vshrl.u32 %v825, 7
    %v827 = vsub.s32 %v824, %v826
    %v828 = vrot.slane %v821, %v827
    %v830 = vunpack.c.l.s4 1966171168
    %v831 = vunpack.c.0.s8 %v830
    %v832 = vlaneseq
    %v833 = vshrl.u32 %v832, 7
    %v834 = vsub.s32 %v831, %v833
    %v835 = vrot.slane %v784, %v834
    %v837 = vunpack.c.l.s4 1966171168
    %v838 = vunpack.c.0.s8 %v837
    %v839 = vlaneseq
    %v840 = vshrl.u32 %v839, 7
    %v841 = vsub.s32 %v838, %v840
    %v842 = vrot.slane %v835, %v841
    %v844 = vunpack.c.l.s4 1966171168
    %v845 = vunpack.c.0.s8 %v844
    %v846 = vlaneseq
    %v847 = vshrl.u32 %v846, 7
    %v848 = vsub.s32 %v845, %v847
    %v849 = vrot.slane %v785, %v848
    %v851 = vunpack.c.l.s4 1966171168
    %v852 = vunpack.c.0.s8 %v851
    %v853 = vlaneseq
    %v854 = vshrl.u32 %v853, 7
    %v855 = vsub.s32 %v852, %v854
    %v856 = vrot.slane %v849, %v855
    %v858 = vunpack.c.l.s4 1966171168
    %v859 = vunpack.c.0.s8 %v858
    %v860 = vlaneseq
    %v861 = vshrl.u32 %v860, 7
    %v862 = vsub.s32 %v859, %v861
    %v863 = vrot.slane %v786, %v862
    %v865 = vunpack.c.l.s4 1966171168
    %v866 = vunpack.c.0.s8 %v865
    %v867 = vlaneseq
    %v868 = vshrl.u32 %v867, 7
    %v869 = vsub.s32 %v866, %v868
    %v870 = vrot.slane %v863, %v869
    %v872 = vunpack.c.l.s4 1966171168
    %v873 = vunpack.c.0.s8 %v872
    %v874 = vlaneseq
    %v875 = vshrl.u32 %v874, 7
    %v876 = vsub.s32 %v873, %v875
    %v877 = vrot.slane %v787, %v876
    %v879 = vunpack.c.l.s4 1966171168
    %v880 = vunpack.c.0.s8 %v879
    %v881 = vlaneseq
    %v882 = vshrl.u32 %v881, 7
    %v883 = vsub.s32 %v880, %v882
    %v884 = vrot.slane %v877, %v883
    %v886 = vunpack.c.l.s4 1966171168
    %v887 = vunpack.c.0.s8 %v886
    %v888 = vlaneseq
    %v889 = vshrl.u32 %v888, 7
    %v890 = vsub.s32 %v887, %v889
    %v891 = vrot.slane %v788, %v890
    %v893 = vunpack.c.l.s4 1966171168
    %v894 = vunpack.c.0.s8 %v893
    %v895 = vlaneseq
    %v896 = vshrl.u32 %v895, 7
    %v897 = vsub.s32 %v894, %v896
    %v898 = vrot.slane %v891, %v897
    %v900 = vunpack.c.l.s4 1966171168
    %v901 = vunpack.c.0.s8 %v900
    %v902 = vlaneseq
    %v903 = vshrl.u32 %v902, 7
    %v904 = vsub.s32 %v901, %v903
    %v905 = vrot.slane %v789, %v904
    %v907 = vunpack.c.l.s4 1966171168
    %v908 = vunpack.c.0.s8 %v907
    %v909 = vlaneseq
    %v910 = vshrl.u32 %v909, 7
    %v911 = vsub.s32 %v908, %v910
    %v912 = vrot.slane %v905, %v911
    %v914 = vunpack.c.l.s4 1966171168
    %v915 = vunpack.c.0.s8 %v914
    %v916 = vlaneseq
    %v917 = vshrl.u32 %v916, 7
    %v918 = vsub.s32 %v915, %v917
    %v919 = vrot.slane %v790, %v918
    %v921 = vunpack.c.l.s4 1966171168
    %v922 = vunpack.c.0.s8 %v921
    %v923 = vlaneseq
    %v924 = vshrl.u32 %v923, 7
    %v925 = vsub.s32 %v922, %v924
    %v926 = vrot.slane %v919, %v925
    %v928 = vunpack.c.l.s4 1966171168
    %v929 = vunpack.c.0.s8 %v928
    %v930 = vlaneseq
    %v931 = vshrl.u32 %v930, 7
    %v932 = vsub.s32 %v929, %v931
    %v933 = vrot.slane %v791, %v932
    %v935 = vunpack.c.l.s4 1966171168
    %v936 = vunpack.c.0.s8 %v935
    %v937 = vlaneseq
    %v938 = vshrl.u32 %v937, 7
    %v939 = vsub.s32 %v936, %v938
    %v940 = vrot.slane %v933, %v939
    %v942 = vunpack.c.l.s4 1966171168
    %v943 = vunpack.c.0.s8 %v942
    %v944 = vlaneseq
    %v945 = vshrl.u32 %v944, 7
    %v946 = vsub.s32 %v943, %v945
    %v947 = vrot.slane %v792, %v946
    %v949 = vunpack.c.l.s4 1966171168
    %v950 = vunpack.c.0.s8 %v949
    %v951 = vlaneseq
    %v952 = vshrl.u32 %v951, 7
    %v953 = vsub.s32 %v950, %v952
    %v954 = vrot.slane %v947, %v953
    %v956 = vunpack.c.l.s4 1966171168
    %v957 = vunpack.c.0.s8 %v956
    %v958 = vlaneseq
    %v959 = vshrl.u32 %v958, 7
    %v960 = vsub.s32 %v957, %v959
    %v961 = vrot.slane %v793, %v960
    %v963 = vunpack.c.l.s4 1966171168
    %v964 = vunpack.c.0.s8 %v963
    %v965 = vlaneseq
    %v966 = vshrl.u32 %v965, 7
    %v967 = vsub.s32 %v964, %v966
    %v968 = vrot.slane %v961, %v967
    %v970 = vunpack.c.l.s4 1966171168
    %v971 = vunpack.c.0.s8 %v970
    %v972 = vlaneseq
    %v973 = vshrl.u32 %v972, 7
    %v974 = vsub.s32 %v971, %v973
    %v975 = vrot.slane %v794, %v974
    %v977 = vunpack.c.l.s4 1966171168
    %v978 = vunpack.c.0.s8 %v977
    %v979 = vlaneseq
    %v980 = vshrl.u32 %v979, 7
    %v981 = vsub.s32 %v978, %v980
    %v982 = vrot.slane %v975, %v981
    %v984 = vunpack.c.l.s4 1966171168
    %v985 = vunpack.c.0.s8 %v984
    %v986 = vlaneseq
    %v987 = vshrl.u32 %v986, 7
    %v988 = vsub.s32 %v985, %v987
    %v989 = vrot.slane %v795, %v988
    %v991 = vunpack.c.l.s4 1966171168
    %v992 = vunpack.c.0.s8 %v991
    %v993 = vlaneseq
    %v994 = vshrl.u32 %v993, 7
    %v995 = vsub.s32 %v992, %v994
    %v996 = vrot.slane %v989, %v995
    %v998 = vunpack.c.l.s4 1966171168
    %v999 = vunpack.c.0.s8 %v998
    %v1000 = vlaneseq
    %v1001 = vshrl.u32 %v1000, 7
    %v1002 = vsub.s32 %v999, %v1001
    %v1003 = vrot.slane %v796, %v1002
    %v1005 = vunpack.c.l.s4 1966171168
    %v1006 = vunpack.c.0.s8 %v1005
    %v1007 = vlaneseq
    %v1008 = vshrl.u32 %v1007, 7
    %v1009 = vsub.s32 %v1006, %v1008
    %v1010 = vrot.slane %v1003, %v1009
    %v1012 = vunpack.c.l.s4 1966171168
    %v1013 = vunpack.c.0.s8 %v1012
    %v1014 = vlaneseq
    %v1015 = vshrl.u32 %v1014, 7
    %v1016 = vsub.s32 %v1013, %v1015
    %v1017 = vrot.slane %v797, %v1016
    %v1019 = vunpack.c.l.s4 1966171168
    %v1020 = vunpack.c.0.s8 %v1019
    %v1021 = vlaneseq
    %v1022 = vshrl.u32 %v1021, 7
    %v1023 = vsub.s32 %v1020, %v1022
    %v1024 = vrot.slane %v1017, %v1023
    %v1026 = vunpack.c.l.s4 1966171168
    %v1027 = vunpack.c.0.s8 %v1026
    %v1028 = vlaneseq
    %v1029 = vshrl.u32 %v1028, 7
    %v1030 = vsub.s32 %v1027, %v1029
    %v1031 = vrot.slane %v798, %v1030
    %v1033 = vunpack.c.l.s4 1966171168
    %v1034 = vunpack.c.0.s8 %v1033
    %v1035 = vlaneseq
    %v1036 = vshrl.u32 %v1035, 7
    %v1037 = vsub.s32 %v1034, %v1036
    %v1038 = vrot.slane %v1031, %v1037
    %1039 = vrot.lane.b32.xlu0 %v828, 97
    %v1040 = vpop.permute.xlu0 %1039
    %1041 = vrot.lane.b32.xlu0 %v842, 97
    %v1042 = vpop.permute.xlu0 %1041
    %1043 = vrot.lane.b32.xlu0 %v856, 97
    %v1044 = vpop.permute.xlu0 %1043
    %1045 = vrot.lane.b32.xlu0 %v870, 97
    %v1046 = vpop.permute.xlu0 %1045
    %1047 = vrot.lane.b32.xlu0 %v884, 97
    %v1048 = vpop.permute.xlu0 %1047
    %1049 = vrot.lane.b32.xlu0 %v898, 97
    %v1050 = vpop.permute.xlu0 %1049
    %1051 = vrot.lane.b32.xlu0 %v912, 97
    %v1052 = vpop.permute.xlu0 %1051
    %1053 = vrot.lane.b32.xlu0 %v926, 97
    %v1054 = vpop.permute.xlu0 %1053
    %1055 = vrot.lane.b32.xlu0 %v940, 97
    %v1056 = vpop.permute.xlu0 %1055
    %1057 = vrot.lane.b32.xlu0 %v954, 97
    %v1058 = vpop.permute.xlu0 %1057
    %1059 = vrot.lane.b32.xlu0 %v968, 97
    %v1060 = vpop.permute.xlu0 %1059
    %1061 = vrot.lane.b32.xlu0 %v982, 97
    %v1062 = vpop.permute.xlu0 %1061
    %1063 = vrot.lane.b32.xlu0 %v996, 97
    %v1064 = vpop.permute.xlu0 %1063
    %1065 = vrot.lane.b32.xlu0 %v1010, 97
    %v1066 = vpop.permute.xlu0 %1065
    %1067 = vrot.lane.b32.xlu0 %v1024, 97
    %v1068 = vpop.permute.xlu0 %1067
    %1069 = vrot.lane.b32.xlu0 %v1038, 97
    %v1070 = vpop.permute.xlu0 %1069
    %v1087 = vadd.f32 %v711, %v1040
    %v1088 = vadd.f32 %v712, %v1042
    %v1089 = vadd.f32 %v713, %v1044
    %v1090 = vadd.f32 %v714, %v1046
    %v1091 = vadd.f32 %v715, %v1048
    %v1092 = vadd.f32 %v716, %v1050
    %v1093 = vadd.f32 %v717, %v1052
    %v1094 = vadd.f32 %v718, %v1054
    %v1095 = vadd.f32 %v719, %v1056
    %v1096 = vadd.f32 %v720, %v1058
    %v1097 = vadd.f32 %v721, %v1060
    %v1098 = vadd.f32 %v722, %v1062
    %v1099 = vadd.f32 %v723, %v1064
    %v1100 = vadd.f32 %v724, %v1066
    %v1101 = vadd.f32 %v725, %v1068
    %v1102 = vadd.f32 %v726, %v1070
    %vm1103 = vcmask 253952
    %1104 = vst.msk [vmem:[#allocation8] sm:$0x1] %vm1103, %v1087
    %1105 = vst.msk [vmem:[#allocation8 + $0x1] sm:$0x1] %vm1103, %v1088
    %1106 = vst.msk [vmem:[#allocation8 + $0x2] sm:$0x1] %vm1103, %v1089
    %1107 = vst.msk [vmem:[#allocation8 + $0x3] sm:$0x1] %vm1103, %v1090
    %1108 = vst.msk [vmem:[#allocation8 + $0x4] sm:$0x1] %vm1103, %v1091
    %1109 = vst.msk [vmem:[#allocation8 + $0x5] sm:$0x1] %vm1103, %v1092
    %1110 = vst.msk [vmem:[#allocation8 + $0x6] sm:$0x1] %vm1103, %v1093
    %1111 = vst.msk [vmem:[#allocation8 + $0x7] sm:$0x1] %vm1103, %v1094
    %1112 = vst.msk [vmem:[#allocation8 + $0x8] sm:$0x1] %vm1103, %v1095
    %1113 = vst.msk [vmem:[#allocation8 + $0x9] sm:$0x1] %vm1103, %v1096
    %1114 = vst.msk [vmem:[#allocation8 + $0xa] sm:$0x1] %vm1103, %v1097
    %1115 = vst.msk [vmem:[#allocation8 + $0xb] sm:$0x1] %vm1103, %v1098
    %1116 = vst.msk [vmem:[#allocation8 + $0xc] sm:$0x1] %vm1103, %v1099
    %1117 = vst.msk [vmem:[#allocation8 + $0xd] sm:$0x1] %vm1103, %v1100
    %1118 = vst.msk [vmem:[#allocation8 + $0xe] sm:$0x1] %vm1103, %v1101
    %1119 = vst.msk [vmem:[#allocation8 + $0xf] sm:$0x1] %vm1103, %v1102
    %v1120 = vld [vmem:[#allocation5] sm:$0x1]
    %v1121 = vld [vmem:[#allocation5 + $0x1] sm:$0x1]
    %v1122 = vld [vmem:[#allocation5 + $0x2] sm:$0x1]
    %v1123 = vld [vmem:[#allocation5 + $0x3] sm:$0x1]
    %v1124 = vld [vmem:[#allocation5 + $0x4] sm:$0x1]
    %v1125 = vld [vmem:[#allocation5 + $0x5] sm:$0x1]
    %v1126 = vld [vmem:[#allocation5 + $0x6] sm:$0x1]
    %v1127 = vld [vmem:[#allocation5 + $0x7] sm:$0x1]
    %v1128 = vld [vmem:[#allocation5 + $0x8] sm:$0x1]
    %v1129 = vld [vmem:[#allocation5 + $0x9] sm:$0x1]
    %v1130 = vld [vmem:[#allocation5 + $0xa] sm:$0x1]
    %v1131 = vld [vmem:[#allocation5 + $0xb] sm:$0x1]
    %v1132 = vld [vmem:[#allocation5 + $0xc] sm:$0x1]
    %v1133 = vld [vmem:[#allocation5 + $0xd] sm:$0x1]
    %v1134 = vld [vmem:[#allocation5 + $0xe] sm:$0x1]
    %v1135 = vld [vmem:[#allocation5 + $0xf] sm:$0x1]
    %1136 = vrot.lane.b32.xlu0 %v1120, 32
    %v1137 = vpop.permute.xlu0 %1136
    %v1138 = vsel %vm80, %v1137, %v1120
    %1139 = vrot.lane.b32.xlu0 %v1121, 32
    %v1140 = vpop.permute.xlu0 %1139
    %v1141 = vsel %vm80, %v1140, %v1121
    %1142 = vrot.lane.b32.xlu0 %v1122, 32
    %v1143 = vpop.permute.xlu0 %1142
    %v1144 = vsel %vm80, %v1143, %v1122
    %1145 = vrot.lane.b32.xlu0 %v1123, 32
    %v1146 = vpop.permute.xlu0 %1145
    %v1147 = vsel %vm80, %v1146, %v1123
    %1148 = vrot.lane.b32.xlu0 %v1124, 32
    %v1149 = vpop.permute.xlu0 %1148
    %v1150 = vsel %vm80, %v1149, %v1124
    %1151 = vrot.lane.b32.xlu0 %v1125, 32
    %v1152 = vpop.permute.xlu0 %1151
    %v1153 = vsel %vm80, %v1152, %v1125
    %1154 = vrot.lane.b32.xlu0 %v1126, 32
    %v1155 = vpop.permute.xlu0 %1154
    %v1156 = vsel %vm80, %v1155, %v1126
    %1157 = vrot.lane.b32.xlu0 %v1127, 32
    %v1158 = vpop.permute.xlu0 %1157
    %v1159 = vsel %vm80, %v1158, %v1127
    %1160 = vrot.lane.b32.xlu0 %v1128, 32
    %v1161 = vpop.permute.xlu0 %1160
    %v1162 = vsel %vm80, %v1161, %v1128
    %1163 = vrot.lane.b32.xlu0 %v1129, 32
    %v1164 = vpop.permute.xlu0 %1163
    %v1165 = vsel %vm80, %v1164, %v1129
    %1166 = vrot.lane.b32.xlu0 %v1130, 32
    %v1167 = vpop.permute.xlu0 %1166
    %v1168 = vsel %vm80, %v1167, %v1130
    %1169 = vrot.lane.b32.xlu0 %v1131, 32
    %v1170 = vpop.permute.xlu0 %1169
    %v1171 = vsel %vm80, %v1170, %v1131
    %1172 = vrot.lane.b32.xlu0 %v1132, 32
    %v1173 = vpop.permute.xlu0 %1172
    %v1174 = vsel %vm80, %v1173, %v1132
    %1175 = vrot.lane.b32.xlu0 %v1133, 32
    %v1176 = vpop.permute.xlu0 %1175
    %v1177 = vsel %vm80, %v1176, %v1133
    %1178 = vrot.lane.b32.xlu0 %v1134, 32
    %v1179 = vpop.permute.xlu0 %1178
    %v1180 = vsel %vm80, %v1179, %v1134
    %1181 = vrot.lane.b32.xlu0 %v1135, 32
    %v1182 = vpop.permute.xlu0 %1181
    %v1183 = vsel %vm80, %v1182, %v1135
    %1184 = vrot.lane.b32.xlu0 %v1138, 32
    %v1185 = vpop.permute.xlu0 %1184
    %1186 = vrot.lane.b32.xlu0 %v1141, 32
    %v1187 = vpop.permute.xlu0 %1186
    %1188 = vrot.lane.b32.xlu0 %v1144, 32
    %v1189 = vpop.permute.xlu0 %1188
    %1190 = vrot.lane.b32.xlu0 %v1147, 32
    %v1191 = vpop.permute.xlu0 %1190
    %1192 = vrot.lane.b32.xlu0 %v1150, 32
    %v1193 = vpop.permute.xlu0 %1192
    %1194 = vrot.lane.b32.xlu0 %v1153, 32
    %v1195 = vpop.permute.xlu0 %1194
    %1196 = vrot.lane.b32.xlu0 %v1156, 32
    %v1197 = vpop.permute.xlu0 %1196
    %1198 = vrot.lane.b32.xlu0 %v1159, 32
    %v1199 = vpop.permute.xlu0 %1198
    %1200 = vrot.lane.b32.xlu0 %v1162, 32
    %v1201 = vpop.permute.xlu0 %1200
    %1202 = vrot.lane.b32.xlu0 %v1165, 32
    %v1203 = vpop.permute.xlu0 %1202
    %1204 = vrot.lane.b32.xlu0 %v1168, 32
    %v1205 = vpop.permute.xlu0 %1204
    %1206 = vrot.lane.b32.xlu0 %v1171, 32
    %v1207 = vpop.permute.xlu0 %1206
    %1208 = vrot.lane.b32.xlu0 %v1174, 32
    %v1209 = vpop.permute.xlu0 %1208
    %1210 = vrot.lane.b32.xlu0 %v1177, 32
    %v1211 = vpop.permute.xlu0 %1210
    %1212 = vrot.lane.b32.xlu0 %v1180, 32
    %v1213 = vpop.permute.xlu0 %1212
    %1214 = vrot.lane.b32.xlu0 %v1183, 32
    %v1215 = vpop.permute.xlu0 %1214
    %v1216 = vsel %vm80, %v1185, %v1120
    %v1217 = vsel %vm80, %v1187, %v1121
    %v1218 = vsel %vm80, %v1189, %v1122
    %v1219 = vsel %vm80, %v1191, %v1123
    %v1220 = vsel %vm80, %v1193, %v1124
    %v1221 = vsel %vm80, %v1195, %v1125
    %v1222 = vsel %vm80, %v1197, %v1126
    %v1223 = vsel %vm80, %v1199, %v1127
    %v1224 = vsel %vm80, %v1201, %v1128
    %v1225 = vsel %vm80, %v1203, %v1129
    %v1226 = vsel %vm80, %v1205, %v1130
    %v1227 = vsel %vm80, %v1207, %v1131
    %v1228 = vsel %vm80, %v1209, %v1132
    %v1229 = vsel %vm80, %v1211, %v1133
    %v1230 = vsel %vm80, %v1213, %v1134
    %v1231 = vsel %vm80, %v1215, %v1135
    %v1232 = vmul.f32 %v1120, %v201
    %v1233 = vmul.f32 %v1121, %v215
    %v1234 = vmul.f32 %v1122, %v223
    %v1235 = vmul.f32 %v1123, %v225
    %v1236 = vmul.f32 %v1124, %v208
    %v1237 = vmul.f32 %v1125, %v222
    %v1238 = vmul.f32 %v1126, %v224
    %v1239 = vmul.f32 %v1127, %v226
    %v1240 = vmul.f32 %v1128, %v201
    %v1241 = vmul.f32 %v1129, %v215
    %v1242 = vmul.f32 %v1130, %v223
    %v1243 = vmul.f32 %v1131, %v225
    %v1244 = vmul.f32 %v1132, %v208
    %v1245 = vmul.f32 %v1133, %v222
    %v1246 = vmul.f32 %v1134, %v224
    %v1247 = vmul.f32 %v1135, %v226
    %v1248 = vmul.f32 %v1216, %v384
    %v1249 = vmul.f32 %v1217, %v386
    %v1250 = vmul.f32 %v1218, %v388
    %v1251 = vmul.f32 %v1219, %v390
    %v1252 = vmul.f32 %v1220, %v392
    %v1253 = vmul.f32 %v1221, %v394
    %v1254 = vmul.f32 %v1222, %v396
    %v1255 = vmul.f32 %v1223, %v398
    %v1256 = vmul.f32 %v1224, %v384
    %v1257 = vmul.f32 %v1225, %v386
    %v1258 = vmul.f32 %v1226, %v388
    %v1259 = vmul.f32 %v1227, %v390
    %v1260 = vmul.f32 %v1228, %v392
    %v1261 = vmul.f32 %v1229, %v394
    %v1262 = vmul.f32 %v1230, %v396
    %v1263 = vmul.f32 %v1231, %v398
    %v1281 = vunpack.c.l.s4 1966171168
    %v1282 = vunpack.c.0.s8 %v1281
    %v1283 = vlaneseq
    %v1284 = vshrl.u32 %v1283, 7
    %v1285 = vsub.s32 %v1282, %v1284
    %v1286 = vrot.slane %v1248, %v1285
    %v1288 = vunpack.c.l.s4 1966171168
    %v1289 = vunpack.c.0.s8 %v1288
    %v1290 = vlaneseq
    %v1291 = vshrl.u32 %v1290, 7
    %v1292 = vsub.s32 %v1289, %v1291
    %v1293 = vrot.slane %v1286, %v1292
    %v1295 = vunpack.c.l.s4 1966171168
    %v1296 = vunpack.c.0.s8 %v1295
    %v1297 = vlaneseq
    %v1298 = vshrl.u32 %v1297, 7
    %v1299 = vsub.s32 %v1296, %v1298
    %v1300 = vrot.slane %v1249, %v1299
    %v1302 = vunpack.c.l.s4 1966171168
    %v1303 = vunpack.c.0.s8 %v1302
    %v1304 = vlaneseq
    %v1305 = vshrl.u32 %v1304, 7
    %v1306 = vsub.s32 %v1303, %v1305
    %v1307 = vrot.slane %v1300, %v1306
    %v1309 = vunpack.c.l.s4 1966171168
    %v1310 = vunpack.c.0.s8 %v1309
    %v1311 = vlaneseq
    %v1312 = vshrl.u32 %v1311, 7
    %v1313 = vsub.s32 %v1310, %v1312
    %v1314 = vrot.slane %v1250, %v1313
    %v1316 = vunpack.c.l.s4 1966171168
    %v1317 = vunpack.c.0.s8 %v1316
    %v1318 = vlaneseq
    %v1319 = vshrl.u32 %v1318, 7
    %v1320 = vsub.s32 %v1317, %v1319
    %v1321 = vrot.slane %v1314, %v1320
    %v1323 = vunpack.c.l.s4 1966171168
    %v1324 = vunpack.c.0.s8 %v1323
    %v1325 = vlaneseq
    %v1326 = vshrl.u32 %v1325, 7
    %v1327 = vsub.s32 %v1324, %v1326
    %v1328 = vrot.slane %v1251, %v1327
    %v1330 = vunpack.c.l.s4 1966171168
    %v1331 = vunpack.c.0.s8 %v1330
    %v1332 = vlaneseq
    %v1333 = vshrl.u32 %v1332, 7
    %v1334 = vsub.s32 %v1331, %v1333
    %v1335 = vrot.slane %v1328, %v1334
    %v1337 = vunpack.c.l.s4 1966171168
    %v1338 = vunpack.c.0.s8 %v1337
    %v1339 = vlaneseq
    %v1340 = vshrl.u32 %v1339, 7
    %v1341 = vsub.s32 %v1338, %v1340
    %v1342 = vrot.slane %v1252, %v1341
    %v1344 = vunpack.c.l.s4 1966171168
    %v1345 = vunpack.c.0.s8 %v1344
    %v1346 = vlaneseq
    %v1347 = vshrl.u32 %v1346, 7
    %v1348 = vsub.s32 %v1345, %v1347
    %v1349 = vrot.slane %v1342, %v1348
    %v1351 = vunpack.c.l.s4 1966171168
    %v1352 = vunpack.c.0.s8 %v1351
    %v1353 = vlaneseq
    %v1354 = vshrl.u32 %v1353, 7
    %v1355 = vsub.s32 %v1352, %v1354
    %v1356 = vrot.slane %v1253, %v1355
    %v1358 = vunpack.c.l.s4 1966171168
    %v1359 = vunpack.c.0.s8 %v1358
    %v1360 = vlaneseq
    %v1361 = vshrl.u32 %v1360, 7
    %v1362 = vsub.s32 %v1359, %v1361
    %v1363 = vrot.slane %v1356, %v1362
    %v1365 = vunpack.c.l.s4 1966171168
    %v1366 = vunpack.c.0.s8 %v1365
    %v1367 = vlaneseq
    %v1368 = vshrl.u32 %v1367, 7
    %v1369 = vsub.s32 %v1366, %v1368
    %v1370 = vrot.slane %v1254, %v1369
    %v1372 = vunpack.c.l.s4 1966171168
    %v1373 = vunpack.c.0.s8 %v1372
    %v1374 = vlaneseq
    %v1375 = vshrl.u32 %v1374, 7
    %v1376 = vsub.s32 %v1373, %v1375
    %v1377 = vrot.slane %v1370, %v1376
    %v1379 = vunpack.c.l.s4 1966171168
    %v1380 = vunpack.c.0.s8 %v1379
    %v1381 = vlaneseq
    %v1382 = vshrl.u32 %v1381, 7
    %v1383 = vsub.s32 %v1380, %v1382
    %v1384 = vrot.slane %v1255, %v1383
    %v1386 = vunpack.c.l.s4 1966171168
    %v1387 = vunpack.c.0.s8 %v1386
    %v1388 = vlaneseq
    %v1389 = vshrl.u32 %v1388, 7
    %v1390 = vsub.s32 %v1387, %v1389
    %v1391 = vrot.slane %v1384, %v1390
    %v1393 = vunpack.c.l.s4 1966171168
    %v1394 = vunpack.c.0.s8 %v1393
    %v1395 = vlaneseq
    %v1396 = vshrl.u32 %v1395, 7
    %v1397 = vsub.s32 %v1394, %v1396
    %v1398 = vrot.slane %v1256, %v1397
    %v1400 = vunpack.c.l.s4 1966171168
    %v1401 = vunpack.c.0.s8 %v1400
    %v1402 = vlaneseq
    %v1403 = vshrl.u32 %v1402, 7
    %v1404 = vsub.s32 %v1401, %v1403
    %v1405 = vrot.slane %v1398, %v1404
    %v1407 = vunpack.c.l.s4 1966171168
    %v1408 = vunpack.c.0.s8 %v1407
    %v1409 = vlaneseq
    %v1410 = vshrl.u32 %v1409, 7
    %v1411 = vsub.s32 %v1408, %v1410
    %v1412 = vrot.slane %v1257, %v1411
    %v1414 = vunpack.c.l.s4 1966171168
    %v1415 = vunpack.c.0.s8 %v1414
    %v1416 = vlaneseq
    %v1417 = vshrl.u32 %v1416, 7
    %v1418 = vsub.s32 %v1415, %v1417
    %v1419 = vrot.slane %v1412, %v1418
    %v1421 = vunpack.c.l.s4 1966171168
    %v1422 = vunpack.c.0.s8 %v1421
    %v1423 = vlaneseq
    %v1424 = vshrl.u32 %v1423, 7
    %v1425 = vsub.s32 %v1422, %v1424
    %v1426 = vrot.slane %v1258, %v1425
    %v1428 = vunpack.c.l.s4 1966171168
    %v1429 = vunpack.c.0.s8 %v1428
    %v1430 = vlaneseq
    %v1431 = vshrl.u32 %v1430, 7
    %v1432 = vsub.s32 %v1429, %v1431
    %v1433 = vrot.slane %v1426, %v1432
    %v1435 = vunpack.c.l.s4 1966171168
    %v1436 = vunpack.c.0.s8 %v1435
    %v1437 = vlaneseq
    %v1438 = vshrl.u32 %v1437, 7
    %v1439 = vsub.s32 %v1436, %v1438
    %v1440 = vrot.slane %v1259, %v1439
    %v1442 = vunpack.c.l.s4 1966171168
    %v1443 = vunpack.c.0.s8 %v1442
    %v1444 = vlaneseq
    %v1445 = vshrl.u32 %v1444, 7
    %v1446 = vsub.s32 %v1443, %v1445
    %v1447 = vrot.slane %v1440, %v1446
    %v1449 = vunpack.c.l.s4 1966171168
    %v1450 = vunpack.c.0.s8 %v1449
    %v1451 = vlaneseq
    %v1452 = vshrl.u32 %v1451, 7
    %v1453 = vsub.s32 %v1450, %v1452
    %v1454 = vrot.slane %v1260, %v1453
    %v1456 = vunpack.c.l.s4 1966171168
    %v1457 = vunpack.c.0.s8 %v1456
    %v1458 = vlaneseq
    %v1459 = vshrl.u32 %v1458, 7
    %v1460 = vsub.s32 %v1457, %v1459
    %v1461 = vrot.slane %v1454, %v1460
    %v1463 = vunpack.c.l.s4 1966171168
    %v1464 = vunpack.c.0.s8 %v1463
    %v1465 = vlaneseq
    %v1466 = vshrl.u32 %v1465, 7
    %v1467 = vsub.s32 %v1464, %v1466
    %v1468 = vrot.slane %v1261, %v1467
    %v1470 = vunpack.c.l.s4 1966171168
    %v1471 = vunpack.c.0.s8 %v1470
    %v1472 = vlaneseq
    %v1473 = vshrl.u32 %v1472, 7
    %v1474 = vsub.s32 %v1471, %v1473
    %v1475 = vrot.slane %v1468, %v1474
    %v1477 = vunpack.c.l.s4 1966171168
    %v1478 = vunpack.c.0.s8 %v1477
    %v1479 = vlaneseq
    %v1480 = vshrl.u32 %v1479, 7
    %v1481 = vsub.s32 %v1478, %v1480
    %v1482 = vrot.slane %v1262, %v1481
    %v1484 = vunpack.c.l.s4 1966171168
    %v1485 = vunpack.c.0.s8 %v1484
    %v1486 = vlaneseq
    %v1487 = vshrl.u32 %v1486, 7
    %v1488 = vsub.s32 %v1485, %v1487
    %v1489 = vrot.slane %v1482, %v1488
    %v1491 = vunpack.c.l.s4 1966171168
    %v1492 = vunpack.c.0.s8 %v1491
    %v1493 = vlaneseq
    %v1494 = vshrl.u32 %v1493, 7
    %v1495 = vsub.s32 %v1492, %v1494
    %v1496 = vrot.slane %v1263, %v1495
    %v1498 = vunpack.c.l.s4 1966171168
    %v1499 = vunpack.c.0.s8 %v1498
    %v1500 = vlaneseq
    %v1501 = vshrl.u32 %v1500, 7
    %v1502 = vsub.s32 %v1499, %v1501
    %v1503 = vrot.slane %v1496, %v1502
    %1504 = vrot.lane.b32.xlu0 %v1293, 127
    %v1505 = vpop.permute.xlu0 %1504
    %1506 = vrot.lane.b32.xlu0 %v1307, 127
    %v1507 = vpop.permute.xlu0 %1506
    %1508 = vrot.lane.b32.xlu0 %v1321, 127
    %v1509 = vpop.permute.xlu0 %1508
    %1510 = vrot.lane.b32.xlu0 %v1335, 127
    %v1511 = vpop.permute.xlu0 %1510
    %1512 = vrot.lane.b32.xlu0 %v1349, 127
    %v1513 = vpop.permute.xlu0 %1512
    %1514 = vrot.lane.b32.xlu0 %v1363, 127
    %v1515 = vpop.permute.xlu0 %1514
    %1516 = vrot.lane.b32.xlu0 %v1377, 127
    %v1517 = vpop.permute.xlu0 %1516
    %1518 = vrot.lane.b32.xlu0 %v1391, 127
    %v1519 = vpop.permute.xlu0 %1518
    %1520 = vrot.lane.b32.xlu0 %v1405, 127
    %v1521 = vpop.permute.xlu0 %1520
    %1522 = vrot.lane.b32.xlu0 %v1419, 127
    %v1523 = vpop.permute.xlu0 %1522
    %1524 = vrot.lane.b32.xlu0 %v1433, 127
    %v1525 = vpop.permute.xlu0 %1524
    %1526 = vrot.lane.b32.xlu0 %v1447, 127
    %v1527 = vpop.permute.xlu0 %1526
    %1528 = vrot.lane.b32.xlu0 %v1461, 127
    %v1529 = vpop.permute.xlu0 %1528
    %1530 = vrot.lane.b32.xlu0 %v1475, 127
    %v1531 = vpop.permute.xlu0 %1530
    %1532 = vrot.lane.b32.xlu0 %v1489, 127
    %v1533 = vpop.permute.xlu0 %1532
    %1534 = vrot.lane.b32.xlu0 %v1503, 127
    %v1535 = vpop.permute.xlu0 %1534
    %v1552 = vadd.f32 %v1232, %v1505
    %v1553 = vadd.f32 %v1233, %v1507
    %v1554 = vadd.f32 %v1234, %v1509
    %v1555 = vadd.f32 %v1235, %v1511
    %v1556 = vadd.f32 %v1236, %v1513
    %v1557 = vadd.f32 %v1237, %v1515
    %v1558 = vadd.f32 %v1238, %v1517
    %v1559 = vadd.f32 %v1239, %v1519
    %v1560 = vadd.f32 %v1240, %v1521
    %v1561 = vadd.f32 %v1241, %v1523
    %v1562 = vadd.f32 %v1242, %v1525
    %v1563 = vadd.f32 %v1243, %v1527
    %v1564 = vadd.f32 %v1244, %v1529
    %v1565 = vadd.f32 %v1245, %v1531
    %v1566 = vadd.f32 %v1246, %v1533
    %v1567 = vadd.f32 %v1247, %v1535
    %v1568 = vmul.f32 %v1216, %v760
    %v1569 = vmul.f32 %v1217, %v762
    %v1570 = vmul.f32 %v1218, %v764
    %v1571 = vmul.f32 %v1219, %v766
    %v1572 = vmul.f32 %v1220, %v768
    %v1573 = vmul.f32 %v1221, %v770
    %v1574 = vmul.f32 %v1222, %v772
    %v1575 = vmul.f32 %v1223, %v774
    %v1576 = vmul.f32 %v1224, %v760
    %v1577 = vmul.f32 %v1225, %v762
    %v1578 = vmul.f32 %v1226, %v764
    %v1579 = vmul.f32 %v1227, %v766
    %v1580 = vmul.f32 %v1228, %v768
    %v1581 = vmul.f32 %v1229, %v770
    %v1582 = vmul.f32 %v1230, %v772
    %v1583 = vmul.f32 %v1231, %v774
    %v1601 = vunpack.c.l.s4 1966171168
    %v1602 = vunpack.c.0.s8 %v1601
    %v1603 = vlaneseq
    %v1604 = vshrl.u32 %v1603, 7
    %v1605 = vsub.s32 %v1602, %v1604
    %v1606 = vrot.slane %v1568, %v1605
    %v1608 = vunpack.c.l.s4 1966171168
    %v1609 = vunpack.c.0.s8 %v1608
    %v1610 = vlaneseq
    %v1611 = vshrl.u32 %v1610, 7
    %v1612 = vsub.s32 %v1609, %v1611
    %v1613 = vrot.slane %v1606, %v1612
    %v1615 = vunpack.c.l.s4 1966171168
    %v1616 = vunpack.c.0.s8 %v1615
    %v1617 = vlaneseq
    %v1618 = vshrl.u32 %v1617, 7
    %v1619 = vsub.s32 %v1616, %v1618
    %v1620 = vrot.slane %v1569, %v1619
    %v1622 = vunpack.c.l.s4 1966171168
    %v1623 = vunpack.c.0.s8 %v1622
    %v1624 = vlaneseq
    %v1625 = vshrl.u32 %v1624, 7
    %v1626 = vsub.s32 %v1623, %v1625
    %v1627 = vrot.slane %v1620, %v1626
    %v1629 = vunpack.c.l.s4 1966171168
    %v1630 = vunpack.c.0.s8 %v1629
    %v1631 = vlaneseq
    %v1632 = vshrl.u32 %v1631, 7
    %v1633 = vsub.s32 %v1630, %v1632
    %v1634 = vrot.slane %v1570, %v1633
    %v1636 = vunpack.c.l.s4 1966171168
    %v1637 = vunpack.c.0.s8 %v1636
    %v1638 = vlaneseq
    %v1639 = vshrl.u32 %v1638, 7
    %v1640 = vsub.s32 %v1637, %v1639
    %v1641 = vrot.slane %v1634, %v1640
    %v1643 = vunpack.c.l.s4 1966171168
    %v1644 = vunpack.c.0.s8 %v1643
    %v1645 = vlaneseq
    %v1646 = vshrl.u32 %v1645, 7
    %v1647 = vsub.s32 %v1644, %v1646
    %v1648 = vrot.slane %v1571, %v1647
    %v1650 = vunpack.c.l.s4 1966171168
    %v1651 = vunpack.c.0.s8 %v1650
    %v1652 = vlaneseq
    %v1653 = vshrl.u32 %v1652, 7
    %v1654 = vsub.s32 %v1651, %v1653
    %v1655 = vrot.slane %v1648, %v1654
    %v1657 = vunpack.c.l.s4 1966171168
    %v1658 = vunpack.c.0.s8 %v1657
    %v1659 = vlaneseq
    %v1660 = vshrl.u32 %v1659, 7
    %v1661 = vsub.s32 %v1658, %v1660
    %v1662 = vrot.slane %v1572, %v1661
    %v1664 = vunpack.c.l.s4 1966171168
    %v1665 = vunpack.c.0.s8 %v1664
    %v1666 = vlaneseq
    %v1667 = vshrl.u32 %v1666, 7
    %v1668 = vsub.s32 %v1665, %v1667
    %v1669 = vrot.slane %v1662, %v1668
    %v1671 = vunpack.c.l.s4 1966171168
    %v1672 = vunpack.c.0.s8 %v1671
    %v1673 = vlaneseq
    %v1674 = vshrl.u32 %v1673, 7
    %v1675 = vsub.s32 %v1672, %v1674
    %v1676 = vrot.slane %v1573, %v1675
    %v1678 = vunpack.c.l.s4 1966171168
    %v1679 = vunpack.c.0.s8 %v1678
    %v1680 = vlaneseq
    %v1681 = vshrl.u32 %v1680, 7
    %v1682 = vsub.s32 %v1679, %v1681
    %v1683 = vrot.slane %v1676, %v1682
    %v1685 = vunpack.c.l.s4 1966171168
    %v1686 = vunpack.c.0.s8 %v1685
    %v1687 = vlaneseq
    %v1688 = vshrl.u32 %v1687, 7
    %v1689 = vsub.s32 %v1686, %v1688
    %v1690 = vrot.slane %v1574, %v1689
    %v1692 = vunpack.c.l.s4 1966171168
    %v1693 = vunpack.c.0.s8 %v1692
    %v1694 = vlaneseq
    %v1695 = vshrl.u32 %v1694, 7
    %v1696 = vsub.s32 %v1693, %v1695
    %v1697 = vrot.slane %v1690, %v1696
    %v1699 = vunpack.c.l.s4 1966171168
    %v1700 = vunpack.c.0.s8 %v1699
    %v1701 = vlaneseq
    %v1702 = vshrl.u32 %v1701, 7
    %v1703 = vsub.s32 %v1700, %v1702
    %v1704 = vrot.slane %v1575, %v1703
    %v1706 = vunpack.c.l.s4 1966171168
    %v1707 = vunpack.c.0.s8 %v1706
    %v1708 = vlaneseq
    %v1709 = vshrl.u32 %v1708, 7
    %v1710 = vsub.s32 %v1707, %v1709
    %v1711 = vrot.slane %v1704, %v1710
    %v1713 = vunpack.c.l.s4 1966171168
    %v1714 = vunpack.c.0.s8 %v1713
    %v1715 = vlaneseq
    %v1716 = vshrl.u32 %v1715, 7
    %v1717 = vsub.s32 %v1714, %v1716
    %v1718 = vrot.slane %v1576, %v1717
    %v1720 = vunpack.c.l.s4 1966171168
    %v1721 = vunpack.c.0.s8 %v1720
    %v1722 = vlaneseq
    %v1723 = vshrl.u32 %v1722, 7
    %v1724 = vsub.s32 %v1721, %v1723
    %v1725 = vrot.slane %v1718, %v1724
    %v1727 = vunpack.c.l.s4 1966171168
    %v1728 = vunpack.c.0.s8 %v1727
    %v1729 = vlaneseq
    %v1730 = vshrl.u32 %v1729, 7
    %v1731 = vsub.s32 %v1728, %v1730
    %v1732 = vrot.slane %v1577, %v1731
    %v1734 = vunpack.c.l.s4 1966171168
    %v1735 = vunpack.c.0.s8 %v1734
    %v1736 = vlaneseq
    %v1737 = vshrl.u32 %v1736, 7
    %v1738 = vsub.s32 %v1735, %v1737
    %v1739 = vrot.slane %v1732, %v1738
    %v1741 = vunpack.c.l.s4 1966171168
    %v1742 = vunpack.c.0.s8 %v1741
    %v1743 = vlaneseq
    %v1744 = vshrl.u32 %v1743, 7
    %v1745 = vsub.s32 %v1742, %v1744
    %v1746 = vrot.slane %v1578, %v1745
    %v1748 = vunpack.c.l.s4 1966171168
    %v1749 = vunpack.c.0.s8 %v1748
    %v1750 = vlaneseq
    %v1751 = vshrl.u32 %v1750, 7
    %v1752 = vsub.s32 %v1749, %v1751
    %v1753 = vrot.slane %v1746, %v1752
    %v1755 = vunpack.c.l.s4 1966171168
    %v1756 = vunpack.c.0.s8 %v1755
    %v1757 = vlaneseq
    %v1758 = vshrl.u32 %v1757, 7
    %v1759 = vsub.s32 %v1756, %v1758
    %v1760 = vrot.slane %v1579, %v1759
    %v1762 = vunpack.c.l.s4 1966171168
    %v1763 = vunpack.c.0.s8 %v1762
    %v1764 = vlaneseq
    %v1765 = vshrl.u32 %v1764, 7
    %v1766 = vsub.s32 %v1763, %v1765
    %v1767 = vrot.slane %v1760, %v1766
    %v1769 = vunpack.c.l.s4 1966171168
    %v1770 = vunpack.c.0.s8 %v1769
    %v1771 = vlaneseq
    %v1772 = vshrl.u32 %v1771, 7
    %v1773 = vsub.s32 %v1770, %v1772
    %v1774 = vrot.slane %v1580, %v1773
    %v1776 = vunpack.c.l.s4 1966171168
    %v1777 = vunpack.c.0.s8 %v1776
    %v1778 = vlaneseq
    %v1779 = vshrl.u32 %v1778, 7
    %v1780 = vsub.s32 %v1777, %v1779
    %v1781 = vrot.slane %v1774, %v1780
    %v1783 = vunpack.c.l.s4 1966171168
    %v1784 = vunpack.c.0.s8 %v1783
    %v1785 = vlaneseq
    %v1786 = vshrl.u32 %v1785, 7
    %v1787 = vsub.s32 %v1784, %v1786
    %v1788 = vrot.slane %v1581, %v1787
    %v1790 = vunpack.c.l.s4 1966171168
    %v1791 = vunpack.c.0.s8 %v1790
    %v1792 = vlaneseq
    %v1793 = vshrl.u32 %v1792, 7
    %v1794 = vsub.s32 %v1791, %v1793
    %v1795 = vrot.slane %v1788, %v1794
    %v1797 = vunpack.c.l.s4 1966171168
    %v1798 = vunpack.c.0.s8 %v1797
    %v1799 = vlaneseq
    %v1800 = vshrl.u32 %v1799, 7
    %v1801 = vsub.s32 %v1798, %v1800
    %v1802 = vrot.slane %v1582, %v1801
    %v1804 = vunpack.c.l.s4 1966171168
    %v1805 = vunpack.c.0.s8 %v1804
    %v1806 = vlaneseq
    %v1807 = vshrl.u32 %v1806, 7
    %v1808 = vsub.s32 %v1805, %v1807
    %v1809 = vrot.slane %v1802, %v1808
    %v1811 = vunpack.c.l.s4 1966171168
    %v1812 = vunpack.c.0.s8 %v1811
    %v1813 = vlaneseq
    %v1814 = vshrl.u32 %v1813, 7
    %v1815 = vsub.s32 %v1812, %v1814
    %v1816 = vrot.slane %v1583, %v1815
    %v1818 = vunpack.c.l.s4 1966171168
    %v1819 = vunpack.c.0.s8 %v1818
    %v1820 = vlaneseq
    %v1821 = vshrl.u32 %v1820, 7
    %v1822 = vsub.s32 %v1819, %v1821
    %v1823 = vrot.slane %v1816, %v1822
    %1824 = vrot.lane.b32.xlu0 %v1613, 97
    %v1825 = vpop.permute.xlu0 %1824
    %1826 = vrot.lane.b32.xlu0 %v1627, 97
    %v1827 = vpop.permute.xlu0 %1826
    %1828 = vrot.lane.b32.xlu0 %v1641, 97
    %v1829 = vpop.permute.xlu0 %1828
    %1830 = vrot.lane.b32.xlu0 %v1655, 97
    %v1831 = vpop.permute.xlu0 %1830
    %1832 = vrot.lane.b32.xlu0 %v1669, 97
    %v1833 = vpop.permute.xlu0 %1832
    %1834 = vrot.lane.b32.xlu0 %v1683, 97
    %v1835 = vpop.permute.xlu0 %1834
    %1836 = vrot.lane.b32.xlu0 %v1697, 97
    %v1837 = vpop.permute.xlu0 %1836
    %1838 = vrot.lane.b32.xlu0 %v1711, 97
    %v1839 = vpop.permute.xlu0 %1838
    %1840 = vrot.lane.b32.xlu0 %v1725, 97
    %v1841 = vpop.permute.xlu0 %1840
    %1842 = vrot.lane.b32.xlu0 %v1739, 97
    %v1843 = vpop.permute.xlu0 %1842
    %1844 = vrot.lane.b32.xlu0 %v1753, 97
    %v1845 = vpop.permute.xlu0 %1844
    %1846 = vrot.lane.b32.xlu0 %v1767, 97
    %v1847 = vpop.permute.xlu0 %1846
    %1848 = vrot.lane.b32.xlu0 %v1781, 97
    %v1849 = vpop.permute.xlu0 %1848
    %1850 = vrot.lane.b32.xlu0 %v1795, 97
    %v1851 = vpop.permute.xlu0 %1850
    %1852 = vrot.lane.b32.xlu0 %v1809, 97
    %v1853 = vpop.permute.xlu0 %1852
    %1854 = vrot.lane.b32.xlu0 %v1823, 97
    %v1855 = vpop.permute.xlu0 %1854
    %v1872 = vadd.f32 %v1552, %v1825
    %v1873 = vadd.f32 %v1553, %v1827
    %v1874 = vadd.f32 %v1554, %v1829
    %v1875 = vadd.f32 %v1555, %v1831
    %v1876 = vadd.f32 %v1556, %v1833
    %v1877 = vadd.f32 %v1557, %v1835
    %v1878 = vadd.f32 %v1558, %v1837
    %v1879 = vadd.f32 %v1559, %v1839
    %v1880 = vadd.f32 %v1560, %v1841
    %v1881 = vadd.f32 %v1561, %v1843
    %v1882 = vadd.f32 %v1562, %v1845
    %v1883 = vadd.f32 %v1563, %v1847
    %v1884 = vadd.f32 %v1564, %v1849
    %v1885 = vadd.f32 %v1565, %v1851
    %v1886 = vadd.f32 %v1566, %v1853
    %v1887 = vadd.f32 %v1567, %v1855
    %1888 = vst.msk [vmem:[#allocation9] sm:$0x1] %vm1103, %v1872
    %1889 = vst.msk [vmem:[#allocation9 + $0x1] sm:$0x1] %vm1103, %v1873
    %1890 = vst.msk [vmem:[#allocation9 + $0x2] sm:$0x1] %vm1103, %v1874
    %1891 = vst.msk [vmem:[#allocation9 + $0x3] sm:$0x1] %vm1103, %v1875
    %1892 = vst.msk [vmem:[#allocation9 + $0x4] sm:$0x1] %vm1103, %v1876
    %1893 = vst.msk [vmem:[#allocation9 + $0x5] sm:$0x1] %vm1103, %v1877
    %1894 = vst.msk [vmem:[#allocation9 + $0x6] sm:$0x1] %vm1103, %v1878
    %1895 = vst.msk [vmem:[#allocation9 + $0x7] sm:$0x1] %vm1103, %v1879
    %1896 = vst.msk [vmem:[#allocation9 + $0x8] sm:$0x1] %vm1103, %v1880
    %1897 = vst.msk [vmem:[#allocation9 + $0x9] sm:$0x1] %vm1103, %v1881
    %1898 = vst.msk [vmem:[#allocation9 + $0xa] sm:$0x1] %vm1103, %v1882
    %1899 = vst.msk [vmem:[#allocation9 + $0xb] sm:$0x1] %vm1103, %v1883
    %1900 = vst.msk [vmem:[#allocation9 + $0xc] sm:$0x1] %vm1103, %v1884
    %1901 = vst.msk [vmem:[#allocation9 + $0xd] sm:$0x1] %vm1103, %v1885
    %1902 = vst.msk [vmem:[#allocation9 + $0xe] sm:$0x1] %vm1103, %v1886
    %1903 = vst.msk [vmem:[#allocation9 + $0xf] sm:$0x1] %vm1103, %v1887
    // Predicated region
    $region26: #{tpu_custom_call.1} parent=1 // pred_check
      _
    $region27: #{tpu_custom_call.1} parent=1 // pred_check_branch
      %1905 = sbr.rel (0) target = $region29
    $region28: #{tpu_custom_call.1} parent=1 // pred_region
      %s1907 = ssub.s32 256, 256
      %1908 = vsyncadd [#allocation4], %s1907
      %s1909 = sshll.u32 [#allocation8], 4
      %s1910 = int_to_ptr.vmem [resolvable:$true] %s1909
      %1915 = dma.vmem_to_hbm [thread:$0]  %s1910, 256, %s3, [#allocation4], 16, 16, 1
    $region29: #{tpu_custom_call.1} parent=1 // pred_fallthru
      _
    // Predicated region
    $region30: #{tpu_custom_call.1} parent=1 // pred_check
      _
    $region31: #{tpu_custom_call.1} parent=1 // pred_check_branch
      %1917 = sbr.rel (0) target = $region33
    $region32: #{tpu_custom_call.1} parent=1 // pred_region
      %s1919 = ssub.s32 256, 256
      %1920 = vsyncadd [#allocation10], %s1919
      %s1921 = sshll.u32 [#allocation9], 4
      %s1922 = int_to_ptr.vmem [resolvable:$true] %s1921
      %1927 = dma.vmem_to_hbm [thread:$0]  %s1922, 256, %s4, [#allocation10], 16, 16, 1
    $region33: #{tpu_custom_call.1} parent=1 // pred_fallthru
      _
    // Predicated region
    $region34: #{tpu_custom_call.1} parent=1 // pred_check
      _
    $region35: #{tpu_custom_call.1} parent=1 // pred_check_branch
      %1929 = sbr.rel (0) target = $region37
    $region36: #{tpu_custom_call.1} parent=1 // pred_region
      %1930 = dma.done [#allocation4], 256
    $region37: #{tpu_custom_call.1} parent=1 // pred_fallthru
      _
    // Predicated region
    $region38: #{tpu_custom_call.1} parent=1 // pred_check
      _
    $region39: #{tpu_custom_call.1} parent=1 // pred_check_branch
      %1932 = sbr.rel (0) target = $region41
    $region40: #{tpu_custom_call.1} parent=1 // pred_region
      %1933 = dma.done [#allocation10], 256
    $region41: #{tpu_custom_call.1} parent=1 // pred_fallthru
      _
    %1934 = vsyncpa [#allocation3], 1
    %1935 = vsyncpa [#allocation6], 1
    %1936 = vsyncpa [#allocation4], 1
    %1937 = vsyncpa [#allocation10], 1

</llo_original>
